<compile_context>
chip_gen: v5e
topology: v5e:2x2
jax: 0.10.0
libtpu: 0.0.40
codegen_flags: <defaults>
</compile_context>

<pallas_src>
import jax
import jax.numpy as jnp
from jax import lax
from jax.experimental import pallas as pl
from jax.experimental.pallas import tpu as pltpu


def _double_conv_kernel(x_ref, w1_ref, s1_ref, b1_ref, w2_ref, s2_ref, b2_ref,
                        o_ref, xpad_ref, midpad_ref):
    # x_ref:      (1, Cin, H, W)           one batch element, NCHW
    # w1_ref:     (3, 3, Cmid, Cin)        conv1 weights, tap-major
    # s1/b1_ref:  (Cmid, 1)                folded BN1 scale / bias
    # w2_ref:     (3, 3, Cout, Cmid)       conv2 weights, tap-major
    # s2/b2_ref:  (Cout, 1)                folded BN2 scale / bias
    # o_ref:      (1, Cout, H*W)           lane-dense output block
    # xpad_ref:   (Cin, H+3, W+2)   VMEM   zero-padded input (+1 spare zero row)
    # midpad_ref: (Cmid, (H+3)*(W+2)) VMEM zero-padded mid activation, flat
    _, Cin, H, W = x_ref.shape
    Cout = o_ref.shape[1]
    Cmid = midpad_ref.shape[0]
    Wp = W + 2
    HWp = H * Wp                         # accumulator width (W-padded rows)
    flat_len = xpad_ref.shape[1] * Wp    # (H+3)*Wp covers the largest tap slice

    # ---- stage input into the zero-padded scratch (halo handled in-kernel) ----
    xpad_ref[...] = jnp.zeros_like(xpad_ref)
    xpad_ref[:, 1:H + 1, 1:W + 1] = x_ref[0]
    x_flat = xpad_ref[...].reshape(Cin, flat_len)

    def conv3x3_bn_relu(src_flat, w_ref, s_ref, b_ref, c_out):
        # src_flat: (C, flat) flattened zero-padded image, row stride Wp.
        # For output flat index r = y*Wp + x, tap (dy, dx) reads
        # src_flat[:, r + dy*Wp + dx] -> one contiguous static lane slice per
        # tap feeding a (c_out, C) @ (C, H*Wp) MXU matmul.
        acc = jnp.zeros((c_out, HWp), jnp.float32)
        for dy in range(3):
            for dx in range(3):
                off = dy * Wp + dx
                patch = src_flat[:, off:off + HWp]               # (C, H*Wp)
                acc = acc + jnp.dot(w_ref[dy, dx], patch,
                                    preferred_element_type=jnp.float32)
        y = acc * s_ref[...] + b_ref[...]                        # fused BN (eval) affine
        return jnp.maximum(y, 0.0)                               # fused ReLU

    # Columns x >= W inside each Wp-wide row are padding lanes of the
    # accumulator domain; zero them before re-padding for the second conv.
    col = lax.broadcasted_iota(jnp.int32, (1, HWp), 1) % Wp
    in_row = col < W

    mid = conv3x3_bn_relu(x_flat, w1_ref, s1_ref, b1_ref, Cmid)  # (Cmid, H*Wp)
    mid = jnp.where(in_row, mid, 0.0)

    # Stage mid into its zero-padded flat scratch: the interior of row y starts
    # at flat position (y+1)*Wp + 1, i.e. a single lane-slice store at Wp+1.
    midpad_ref[...] = jnp.zeros_like(midpad_ref)
    midpad_ref[:, Wp + 1:Wp + 1 + HWp] = mid

    out = conv3x3_bn_relu(midpad_ref[...], w2_ref, s2_ref, b2_ref, Cout)  # (Cout, H*Wp)

    # Drop the 2 padding columns per row -> (Cout, H*W); store lane-dense.
    out = out.reshape(Cout, H, Wp)[:, :, :W].reshape(Cout, H * W)
    o_ref[0] = out.astype(o_ref.dtype)


def _fold_bn(p):
    scale = p["gamma"] / jnp.sqrt(p["var"] + p["eps"])
    bias = p["beta"] - p["mean"] * scale + p["b"] * scale
    return scale, bias


def double_conv(x_nchw, params):
    """Fused DoubleConv forward (eval-mode BN): NCHW in -> NCHW out."""
    N, Cin, H, W = x_nchw.shape
    p1, p2 = params["block1"], params["block2"]
    Cmid = p1["w"].shape[0]
    Cout = p2["w"].shape[0]

    s1, b1 = _fold_bn(p1)
    s2, b2 = _fold_bn(p2)
    # OIHW (PyTorch layout) -> (kh, kw, Cout, Cin): each tap is a clean (Cout, Cin) tile.
    w1 = jnp.transpose(p1["w"], (2, 3, 0, 1))
    w2 = jnp.transpose(p2["w"], (2, 3, 0, 1))

    Wp = W + 2
    flat_len = (H + 3) * Wp

    out_flat = pl.pallas_call(
        _double_conv_kernel,
        out_shape=jax.ShapeDtypeStruct((N, Cout, H * W), jnp.float32),
        grid=(N,),
        in_specs=[
            pl.BlockSpec((1, Cin, H, W), lambda n: (n, 0, 0, 0)),
            pl.BlockSpec((3, 3, Cmid, Cin), lambda n: (0, 0, 0, 0)),
            pl.BlockSpec((Cmid, 1), lambda n: (0, 0)),
            pl.BlockSpec((Cmid, 1), lambda n: (0, 0)),
            pl.BlockSpec((3, 3, Cout, Cmid), lambda n: (0, 0, 0, 0)),
            pl.BlockSpec((Cout, 1), lambda n: (0, 0)),
            pl.BlockSpec((Cout, 1), lambda n: (0, 0)),
        ],
        out_specs=pl.BlockSpec((1, Cout, H * W), lambda n: (n, 0, 0)),
        scratch_shapes=[
            pltpu.VMEM((Cin, H + 3, Wp), jnp.float32),
            pltpu.VMEM((Cmid, flat_len), jnp.float32),
        ],
        compiler_params=pltpu.CompilerParams(
            dimension_semantics=("parallel",)),   # megacore: shard batch across TCs
    )(x_nchw,
      w1, s1.reshape(Cmid, 1), b1.reshape(Cmid, 1),
      w2, s2.reshape(Cout, 1), b2.reshape(Cout, 1))

    # Free (row-major) reshape: (N, Cout, H*W) -> (N, Cout, H, W).
    return out_flat.reshape(N, Cout, H, W)


def init_double_conv_params(key, in_channels, out_channels, mid_channels=None):
    if not mid_channels:
        mid_channels = out_channels
    ks = jax.random.split(key, 8)
    eps = 1e-5

    def make_block(k0, k1, k2, k3, cin, cout):
        w = 0.1 * jax.random.normal(k0, (cout, cin, 3, 3), jnp.float32)   # OIHW
        b = 0.05 * jax.random.normal(k1, (cout,), jnp.float32)            # conv bias
        gamma = 1.0 + 0.1 * jax.random.normal(k2, (cout,), jnp.float32)
        beta = 0.05 * jax.random.normal(k3, (cout,), jnp.float32)
        running_mean = 0.01 * jnp.arange(cout, dtype=jnp.float32)
        running_var = 1.0 + 0.02 * jnp.arange(cout, dtype=jnp.float32)
        return dict(w=w, b=b, gamma=gamma, beta=beta,
                    mean=running_mean, var=running_var, eps=eps)

    return dict(
        block1=make_block(ks[0], ks[1], ks[2], ks[3], in_channels, mid_channels),
        block2=make_block(ks[4], ks[5], ks[6], ks[7], mid_channels, out_channels),
    )


def _ref_double_conv(x_nchw, params):
    """Pure-JAX reference (lax conv, eval-mode BN) for verification."""
    x = x_nchw
    for blk in ("block1", "block2"):
        p = params[blk]
        y = lax.conv_general_dilated(
            x, p["w"], window_strides=(1, 1), padding="SAME",
            dimension_numbers=("NCHW", "OIHW", "NCHW"))
        y = y + p["b"][None, :, None, None]
        y = ((y - p["mean"][None, :, None, None])
             / jnp.sqrt(p["var"][None, :, None, None] + p["eps"])
             * p["gamma"][None, :, None, None]
             + p["beta"][None, :, None, None])
        x = jnp.maximum(y, 0.0)
    return x


if __name__ == "__main__":
    key = jax.random.PRNGKey(0)
    kx, kp = jax.random.split(key)

    N, Cin, H, W = 2, 4, 16, 16
    Cout = 8  # mid_channels defaults to out_channels

    x = jax.random.normal(kx, (N, Cin, H, W), jnp.float32)
    params = init_double_conv_params(kp, Cin, Cout)

    y = double_conv(x, params)
    y = jax.block_until_ready(y)

    y_ref = _ref_double_conv(x, params)
    assert y.shape == (N, Cout, H, W), y.shape
    assert jnp.allclose(y, y_ref, atol=1e-4, rtol=1e-4), \
        float(jnp.max(jnp.abs(y - y_ref)))

    print("KERNEL_OK")
</pallas_src>

<mosaic_0001>
module attributes {stable_mosaic.version = 11 : i64} {
  func.func @_double_conv_kernel(%arg0: i32, %arg1: memref<1x4x16x16xf32, #tpu.memory_space<vmem>>, %arg2: memref<3x3x8x4xf32, #tpu.memory_space<vmem>>, %arg3: memref<8x1xf32, #tpu.memory_space<vmem>>, %arg4: memref<8x1xf32, #tpu.memory_space<vmem>>, %arg5: memref<3x3x8x8xf32, #tpu.memory_space<vmem>>, %arg6: memref<8x1xf32, #tpu.memory_space<vmem>>, %arg7: memref<8x1xf32, #tpu.memory_space<vmem>>, %arg8: memref<1x8x256xf32, #tpu.memory_space<vmem>>, %arg9: memref<4x19x18xf32, #tpu.memory_space<vmem>>, %arg10: memref<8x342xf32, #tpu.memory_space<vmem>>) attributes {dimension_semantics = [#tpu.dimension_semantics<parallel>], iteration_bounds = array<i64: 2>, scalar_prefetch = 0 : i64, scratch_operands = 2 : i64, tpu.core_type = #tpu.core_type<tc>, window_params = [{transform_indices = @transform_0, window_bounds = array<i64: 1, 4, 16, 16>}, {pipeline_mode = #tpu.pipeline_mode<synchronous>, transform_indices = @transform_1, window_bounds = array<i64: 3, 3, 8, 4>}, {pipeline_mode = #tpu.pipeline_mode<synchronous>, transform_indices = @transform_2, window_bounds = array<i64: 8, 1>}, {pipeline_mode = #tpu.pipeline_mode<synchronous>, transform_indices = @transform_3, window_bounds = array<i64: 8, 1>}, {pipeline_mode = #tpu.pipeline_mode<synchronous>, transform_indices = @transform_4, window_bounds = array<i64: 3, 3, 8, 8>}, {pipeline_mode = #tpu.pipeline_mode<synchronous>, transform_indices = @transform_5, window_bounds = array<i64: 8, 1>}, {pipeline_mode = #tpu.pipeline_mode<synchronous>, transform_indices = @transform_6, window_bounds = array<i64: 8, 1>}, {transform_indices = @transform_7, window_bounds = array<i64: 1, 8, 256>}]} {
    %cst = arith.constant 0.000000e+00 : f32
    %0 = vector.broadcast %cst : f32 to vector<4x19x18xf32>
    %c0 = arith.constant 0 : index
    %c0_0 = arith.constant 0 : index
    %c0_1 = arith.constant 0 : index
    %1 = vector.load %arg9[%c0, %c0_0, %c0_1] : memref<4x19x18xf32, #tpu.memory_space<vmem>>, vector<4x19x18xf32>
    tpu.vector_store %arg9[%c0, %c0_0, %c0_1], %0 {strides = array<i32>} : memref<4x19x18xf32, #tpu.memory_space<vmem>>, vector<4x19x18xf32>,
    %c0_2 = arith.constant 0 : index
    %c0_3 = arith.constant 0 : index
    %c0_4 = arith.constant 0 : index
    %c0_5 = arith.constant 0 : index
    %2 = vector.load %arg1[%c0_2, %c0_3, %c0_4, %c0_5] : memref<1x4x16x16xf32, #tpu.memory_space<vmem>>, vector<1x4x16x16xf32>
    %3 = vector.shape_cast %2 : vector<1x4x16x16xf32> to vector<4x16x16xf32>
    %c0_6 = arith.constant 0 : index
    %c1 = arith.constant 1 : index
    %c1_7 = arith.constant 1 : index
    %4 = vector.load %arg9[%c0_6, %c1, %c1_7] : memref<4x19x18xf32, #tpu.memory_space<vmem>>, vector<4x16x16xf32>
    tpu.vector_store %arg9[%c0_6, %c1, %c1_7], %3 {strides = array<i32>} : memref<4x19x18xf32, #tpu.memory_space<vmem>>, vector<4x16x16xf32>,
    %c0_8 = arith.constant 0 : index
    %c0_9 = arith.constant 0 : index
    %c0_10 = arith.constant 0 : index
    %5 = vector.load %arg9[%c0_8, %c0_9, %c0_10] : memref<4x19x18xf32, #tpu.memory_space<vmem>>, vector<4x19x18xf32>
    %6 = vector.shape_cast %5 : vector<4x19x18xf32> to vector<4x342xf32>
    %7 = tpu.iota {dimensions = array<i32: 1>} : vector<1x288xi32>
    %c18_i32 = arith.constant 18 : i32
    %c0_i32 = arith.constant 0 : i32
    %8 = arith.cmpi eq, %c18_i32, %c0_i32 : i32
    %c1_i32 = arith.constant 1 : i32
    %9 = arith.select %8, %c1_i32, %c18_i32 : i32
    %10 = vector.broadcast %9 : i32 to vector<1x288xi32>
    %11 = arith.remsi %7, %10 : vector<1x288xi32>
    %c0_i32_11 = arith.constant 0 : i32
    %12 = vector.broadcast %c0_i32_11 : i32 to vector<1x288xi32>
    %13 = arith.cmpi ne, %11, %12 : vector<1x288xi32>
    %c0_i32_12 = arith.constant 0 : i32
    %14 = vector.broadcast %c0_i32_12 : i32 to vector<1x288xi32>
    %15 = arith.cmpi slt, %11, %14 : vector<1x288xi32>
    %c0_i32_13 = arith.constant 0 : i32
    %16 = arith.cmpi slt, %9, %c0_i32_13 : i32
    %17 = vector.broadcast %16 : i1 to vector<1x288xi1>
    %18 = vector.broadcast %17 : vector<1x288xi1> to vector<1x288xi1>
    %19 = arith.xori %15, %18 : vector<1x288xi1>
    %20 = arith.andi %19, %13 : vector<1x288xi1>
    %21 = vector.broadcast %9 : i32 to vector<1x288xi32>
    %22 = arith.addi %11, %21 : vector<1x288xi32>
    %23 = arith.select %20, %22, %11 : vector<1x288xi1>, vector<1x288xi32>
    %c16_i32 = arith.constant 16 : i32
    %24 = vector.broadcast %c16_i32 : i32 to vector<1x288xi32>
    %25 = arith.cmpi slt, %23, %24 : vector<1x288xi32>
    %cst_14 = arith.constant 0.000000e+00 : f32
    %26 = vector.broadcast %cst_14 : f32 to vector<8x288xf32>
    %27 = vector.extract_strided_slice %6 {offsets = [0, 0], sizes = [4, 288], strides = [1, 1]} : vector<4x342xf32> to vector<4x288xf32>
    %c0_15 = arith.constant 0 : index
    %c0_16 = arith.constant 0 : index
    %c0_17 = arith.constant 0 : index
    %c0_18 = arith.constant 0 : index
    %28 = vector.load %arg2[%c0_15, %c0_16, %c0_17, %c0_18] : memref<3x3x8x4xf32, #tpu.memory_space<vmem>>, vector<1x1x8x4xf32>
    %29 = vector.shape_cast %28 : vector<1x1x8x4xf32> to vector<8x4xf32>
    %cst_19 = arith.constant dense<0.000000e+00> : vector<8x288xf32>
    %30 = tpu.matmul %29, %27, %cst_19 {dimension_numbers = #tpu.dot_dimension_numbers<[1], [0], [0], [1], [0, 0, 1, 1], [], []>} : vector<8x4xf32>, vector<4x288xf32>, vector<8x288xf32> -> vector<8x288xf32>
    %31 = arith.addf %26, %30 : vector<8x288xf32>
    %32 = vector.extract_strided_slice %6 {offsets = [0, 1], sizes = [4, 288], strides = [1, 1]} : vector<4x342xf32> to vector<4x288xf32>
    %c0_20 = arith.constant 0 : index
    %c1_21 = arith.constant 1 : index
    %c0_22 = arith.constant 0 : index
    %c0_23 = arith.constant 0 : index
    %33 = vector.load %arg2[%c0_20, %c1_21, %c0_22, %c0_23] : memref<3x3x8x4xf32, #tpu.memory_space<vmem>>, vector<1x1x8x4xf32>
    %34 = vector.shape_cast %33 : vector<1x1x8x4xf32> to vector<8x4xf32>
    %cst_24 = arith.constant dense<0.000000e+00> : vector<8x288xf32>
    %35 = tpu.matmul %34, %32, %cst_24 {dimension_numbers = #tpu.dot_dimension_numbers<[1], [0], [0], [1], [0, 0, 1, 1], [], []>} : vector<8x4xf32>, vector<4x288xf32>, vector<8x288xf32> -> vector<8x288xf32>
    %36 = arith.addf %31, %35 : vector<8x288xf32>
    %37 = vector.extract_strided_slice %6 {offsets = [0, 2], sizes = [4, 288], strides = [1, 1]} : vector<4x342xf32> to vector<4x288xf32>
    %c0_25 = arith.constant 0 : index
    %c2 = arith.constant 2 : index
    %c0_26 = arith.constant 0 : index
    %c0_27 = arith.constant 0 : index
    %38 = vector.load %arg2[%c0_25, %c2, %c0_26, %c0_27] : memref<3x3x8x4xf32, #tpu.memory_space<vmem>>, vector<1x1x8x4xf32>
    %39 = vector.shape_cast %38 : vector<1x1x8x4xf32> to vector<8x4xf32>
    %cst_28 = arith.constant dense<0.000000e+00> : vector<8x288xf32>
    %40 = tpu.matmul %39, %37, %cst_28 {dimension_numbers = #tpu.dot_dimension_numbers<[1], [0], [0], [1], [0, 0, 1, 1], [], []>} : vector<8x4xf32>, vector<4x288xf32>, vector<8x288xf32> -> vector<8x288xf32>
    %41 = arith.addf %36, %40 : vector<8x288xf32>
    %42 = vector.extract_strided_slice %6 {offsets = [0, 18], sizes = [4, 288], strides = [1, 1]} : vector<4x342xf32> to vector<4x288xf32>
    %c1_29 = arith.constant 1 : index
    %c0_30 = arith.constant 0 : index
    %c0_31 = arith.constant 0 : index
    %c0_32 = arith.constant 0 : index
    %43 = vector.load %arg2[%c1_29, %c0_30, %c0_31, %c0_32] : memref<3x3x8x4xf32, #tpu.memory_space<vmem>>, vector<1x1x8x4xf32>
    %44 = vector.shape_cast %43 : vector<1x1x8x4xf32> to vector<8x4xf32>
    %cst_33 = arith.constant dense<0.000000e+00> : vector<8x288xf32>
    %45 = tpu.matmul %44, %42, %cst_33 {dimension_numbers = #tpu.dot_dimension_numbers<[1], [0], [0], [1], [0, 0, 1, 1], [], []>} : vector<8x4xf32>, vector<4x288xf32>, vector<8x288xf32> -> vector<8x288xf32>
    %46 = arith.addf %41, %45 : vector<8x288xf32>
    %47 = vector.extract_strided_slice %6 {offsets = [0, 19], sizes = [4, 288], strides = [1, 1]} : vector<4x342xf32> to vector<4x288xf32>
    %c1_34 = arith.constant 1 : index
    %c1_35 = arith.constant 1 : index
    %c0_36 = arith.constant 0 : index
    %c0_37 = arith.constant 0 : index
    %48 = vector.load %arg2[%c1_34, %c1_35, %c0_36, %c0_37] : memref<3x3x8x4xf32, #tpu.memory_space<vmem>>, vector<1x1x8x4xf32>
    %49 = vector.shape_cast %48 : vector<1x1x8x4xf32> to vector<8x4xf32>
    %cst_38 = arith.constant dense<0.000000e+00> : vector<8x288xf32>
    %50 = tpu.matmul %49, %47, %cst_38 {dimension_numbers = #tpu.dot_dimension_numbers<[1], [0], [0], [1], [0, 0, 1, 1], [], []>} : vector<8x4xf32>, vector<4x288xf32>, vector<8x288xf32> -> vector<8x288xf32>
    %51 = arith.addf %46, %50 : vector<8x288xf32>
    %52 = vector.extract_strided_slice %6 {offsets = [0, 20], sizes = [4, 288], strides = [1, 1]} : vector<4x342xf32> to vector<4x288xf32>
    %c1_39 = arith.constant 1 : index
    %c2_40 = arith.constant 2 : index
    %c0_41 = arith.constant 0 : index
    %c0_42 = arith.constant 0 : index
    %53 = vector.load %arg2[%c1_39, %c2_40, %c0_41, %c0_42] : memref<3x3x8x4xf32, #tpu.memory_space<vmem>>, vector<1x1x8x4xf32>
    %54 = vector.shape_cast %53 : vector<1x1x8x4xf32> to vector<8x4xf32>
    %cst_43 = arith.constant dense<0.000000e+00> : vector<8x288xf32>
    %55 = tpu.matmul %54, %52, %cst_43 {dimension_numbers = #tpu.dot_dimension_numbers<[1], [0], [0], [1], [0, 0, 1, 1], [], []>} : vector<8x4xf32>, vector<4x288xf32>, vector<8x288xf32> -> vector<8x288xf32>
    %56 = arith.addf %51, %55 : vector<8x288xf32>
    %57 = vector.extract_strided_slice %6 {offsets = [0, 36], sizes = [4, 288], strides = [1, 1]} : vector<4x342xf32> to vector<4x288xf32>
    %c2_44 = arith.constant 2 : index
    %c0_45 = arith.constant 0 : index
    %c0_46 = arith.constant 0 : index
    %c0_47 = arith.constant 0 : index
    %58 = vector.load %arg2[%c2_44, %c0_45, %c0_46, %c0_47] : memref<3x3x8x4xf32, #tpu.memory_space<vmem>>, vector<1x1x8x4xf32>
    %59 = vector.shape_cast %58 : vector<1x1x8x4xf32> to vector<8x4xf32>
    %cst_48 = arith.constant dense<0.000000e+00> : vector<8x288xf32>
    %60 = tpu.matmul %59, %57, %cst_48 {dimension_numbers = #tpu.dot_dimension_numbers<[1], [0], [0], [1], [0, 0, 1, 1], [], []>} : vector<8x4xf32>, vector<4x288xf32>, vector<8x288xf32> -> vector<8x288xf32>
    %61 = arith.addf %56, %60 : vector<8x288xf32>
    %62 = vector.extract_strided_slice %6 {offsets = [0, 37], sizes = [4, 288], strides = [1, 1]} : vector<4x342xf32> to vector<4x288xf32>
    %c2_49 = arith.constant 2 : index
    %c1_50 = arith.constant 1 : index
    %c0_51 = arith.constant 0 : index
    %c0_52 = arith.constant 0 : index
    %63 = vector.load %arg2[%c2_49, %c1_50, %c0_51, %c0_52] : memref<3x3x8x4xf32, #tpu.memory_space<vmem>>, vector<1x1x8x4xf32>
    %64 = vector.shape_cast %63 : vector<1x1x8x4xf32> to vector<8x4xf32>
    %cst_53 = arith.constant dense<0.000000e+00> : vector<8x288xf32>
    %65 = tpu.matmul %64, %62, %cst_53 {dimension_numbers = #tpu.dot_dimension_numbers<[1], [0], [0], [1], [0, 0, 1, 1], [], []>} : vector<8x4xf32>, vector<4x288xf32>, vector<8x288xf32> -> vector<8x288xf32>
    %66 = arith.addf %61, %65 : vector<8x288xf32>
    %67 = vector.extract_strided_slice %6 {offsets = [0, 38], sizes = [4, 288], strides = [1, 1]} : vector<4x342xf32> to vector<4x288xf32>
    %c2_54 = arith.constant 2 : index
    %c2_55 = arith.constant 2 : index
    %c0_56 = arith.constant 0 : index
    %c0_57 = arith.constant 0 : index
    %68 = vector.load %arg2[%c2_54, %c2_55, %c0_56, %c0_57] : memref<3x3x8x4xf32, #tpu.memory_space<vmem>>, vector<1x1x8x4xf32>
    %69 = vector.shape_cast %68 : vector<1x1x8x4xf32> to vector<8x4xf32>
    %cst_58 = arith.constant dense<0.000000e+00> : vector<8x288xf32>
    %70 = tpu.matmul %69, %67, %cst_58 {dimension_numbers = #tpu.dot_dimension_numbers<[1], [0], [0], [1], [0, 0, 1, 1], [], []>} : vector<8x4xf32>, vector<4x288xf32>, vector<8x288xf32> -> vector<8x288xf32>
    %71 = arith.addf %66, %70 : vector<8x288xf32>
    %c0_59 = arith.constant 0 : index
    %c0_60 = arith.constant 0 : index
    %72 = vector.load %arg3[%c0_59, %c0_60] : memref<8x1xf32, #tpu.memory_space<vmem>>, vector<8x1xf32>
    %73 = vector.broadcast %72 : vector<8x1xf32> to vector<8x288xf32>
    %74 = arith.mulf %71, %73 : vector<8x288xf32>
    %c0_61 = arith.constant 0 : index
    %c0_62 = arith.constant 0 : index
    %75 = vector.load %arg4[%c0_61, %c0_62] : memref<8x1xf32, #tpu.memory_space<vmem>>, vector<8x1xf32>
    %76 = vector.broadcast %75 : vector<8x1xf32> to vector<8x288xf32>
    %77 = arith.addf %74, %76 : vector<8x288xf32>
    %cst_63 = arith.constant 0.000000e+00 : f32
    %78 = vector.broadcast %cst_63 : f32 to vector<8x288xf32>
    %79 = arith.maximumf %77, %78 : vector<8x288xf32>
    %cst_64 = arith.constant 0.000000e+00 : f32
    %80 = vector.shape_cast %25 : vector<1x288xi1> to vector<1x288xi1>
    %81 = vector.broadcast %80 : vector<1x288xi1> to vector<8x288xi1>
    %82 = vector.broadcast %cst_64 : f32 to vector<8x288xf32>
    %83 = arith.select %81, %79, %82 : vector<8x288xi1>, vector<8x288xf32>
    %cst_65 = arith.constant 0.000000e+00 : f32
    %84 = vector.broadcast %cst_65 : f32 to vector<8x342xf32>
    %c0_66 = arith.constant 0 : index
    %c0_67 = arith.constant 0 : index
    %85 = vector.load %arg10[%c0_66, %c0_67] : memref<8x342xf32, #tpu.memory_space<vmem>>, vector<8x342xf32>
    tpu.vector_store %arg10[%c0_66, %c0_67], %84 {strides = array<i32>} : memref<8x342xf32, #tpu.memory_space<vmem>>, vector<8x342xf32>,
    %c0_68 = arith.constant 0 : index
    %c19 = arith.constant 19 : index
    %86 = vector.load %arg10[%c0_68, %c19] : memref<8x342xf32, #tpu.memory_space<vmem>>, vector<8x288xf32>
    tpu.vector_store %arg10[%c0_68, %c19], %83 {strides = array<i32>} : memref<8x342xf32, #tpu.memory_space<vmem>>, vector<8x288xf32>,
    %c0_69 = arith.constant 0 : index
    %c0_70 = arith.constant 0 : index
    %87 = vector.load %arg10[%c0_69, %c0_70] : memref<8x342xf32, #tpu.memory_space<vmem>>, vector<8x342xf32>
    %cst_71 = arith.constant 0.000000e+00 : f32
    %88 = vector.broadcast %cst_71 : f32 to vector<8x288xf32>
    %89 = vector.extract_strided_slice %87 {offsets = [0, 0], sizes = [8, 288], strides = [1, 1]} : vector<8x342xf32> to vector<8x288xf32>
    %c0_72 = arith.constant 0 : index
    %c0_73 = arith.constant 0 : index
    %c0_74 = arith.constant 0 : index
    %c0_75 = arith.constant 0 : index
    %90 = vector.load %arg5[%c0_72, %c0_73, %c0_74, %c0_75] : memref<3x3x8x8xf32, #tpu.memory_space<vmem>>, vector<1x1x8x8xf32>
    %91 = vector.shape_cast %90 : vector<1x1x8x8xf32> to vector<8x8xf32>
    %cst_76 = arith.constant dense<0.000000e+00> : vector<8x288xf32>
    %92 = tpu.matmul %91, %89, %cst_76 {dimension_numbers = #tpu.dot_dimension_numbers<[1], [0], [0], [1], [0, 0, 1, 1], [], []>} : vector<8x8xf32>, vector<8x288xf32>, vector<8x288xf32> -> vector<8x288xf32>
    %93 = arith.addf %88, %92 : vector<8x288xf32>
    %94 = vector.extract_strided_slice %87 {offsets = [0, 1], sizes = [8, 288], strides = [1, 1]} : vector<8x342xf32> to vector<8x288xf32>
    %c0_77 = arith.constant 0 : index
    %c1_78 = arith.constant 1 : index
    %c0_79 = arith.constant 0 : index
    %c0_80 = arith.constant 0 : index
    %95 = vector.load %arg5[%c0_77, %c1_78, %c0_79, %c0_80] : memref<3x3x8x8xf32, #tpu.memory_space<vmem>>, vector<1x1x8x8xf32>
    %96 = vector.shape_cast %95 : vector<1x1x8x8xf32> to vector<8x8xf32>
    %cst_81 = arith.constant dense<0.000000e+00> : vector<8x288xf32>
    %97 = tpu.matmul %96, %94, %cst_81 {dimension_numbers = #tpu.dot_dimension_numbers<[1], [0], [0], [1], [0, 0, 1, 1], [], []>} : vector<8x8xf32>, vector<8x288xf32>, vector<8x288xf32> -> vector<8x288xf32>
    %98 = arith.addf %93, %97 : vector<8x288xf32>
    %99 = vector.extract_strided_slice %87 {offsets = [0, 2], sizes = [8, 288], strides = [1, 1]} : vector<8x342xf32> to vector<8x288xf32>
    %c0_82 = arith.constant 0 : index
    %c2_83 = arith.constant 2 : index
    %c0_84 = arith.constant 0 : index
    %c0_85 = arith.constant 0 : index
    %100 = vector.load %arg5[%c0_82, %c2_83, %c0_84, %c0_85] : memref<3x3x8x8xf32, #tpu.memory_space<vmem>>, vector<1x1x8x8xf32>
    %101 = vector.shape_cast %100 : vector<1x1x8x8xf32> to vector<8x8xf32>
    %cst_86 = arith.constant dense<0.000000e+00> : vector<8x288xf32>
    %102 = tpu.matmul %101, %99, %cst_86 {dimension_numbers = #tpu.dot_dimension_numbers<[1], [0], [0], [1], [0, 0, 1, 1], [], []>} : vector<8x8xf32>, vector<8x288xf32>, vector<8x288xf32> -> vector<8x288xf32>
    %103 = arith.addf %98, %102 : vector<8x288xf32>
    %104 = vector.extract_strided_slice %87 {offsets = [0, 18], sizes = [8, 288], strides = [1, 1]} : vector<8x342xf32> to vector<8x288xf32>
    %c1_87 = arith.constant 1 : index
    %c0_88 = arith.constant 0 : index
    %c0_89 = arith.constant 0 : index
    %c0_90 = arith.constant 0 : index
    %105 = vector.load %arg5[%c1_87, %c0_88, %c0_89, %c0_90] : memref<3x3x8x8xf32, #tpu.memory_space<vmem>>, vector<1x1x8x8xf32>
    %106 = vector.shape_cast %105 : vector<1x1x8x8xf32> to vector<8x8xf32>
    %cst_91 = arith.constant dense<0.000000e+00> : vector<8x288xf32>
    %107 = tpu.matmul %106, %104, %cst_91 {dimension_numbers = #tpu.dot_dimension_numbers<[1], [0], [0], [1], [0, 0, 1, 1], [], []>} : vector<8x8xf32>, vector<8x288xf32>, vector<8x288xf32> -> vector<8x288xf32>
    %108 = arith.addf %103, %107 : vector<8x288xf32>
    %109 = vector.extract_strided_slice %87 {offsets = [0, 19], sizes = [8, 288], strides = [1, 1]} : vector<8x342xf32> to vector<8x288xf32>
    %c1_92 = arith.constant 1 : index
    %c1_93 = arith.constant 1 : index
    %c0_94 = arith.constant 0 : index
    %c0_95 = arith.constant 0 : index
    %110 = vector.load %arg5[%c1_92, %c1_93, %c0_94, %c0_95] : memref<3x3x8x8xf32, #tpu.memory_space<vmem>>, vector<1x1x8x8xf32>
    %111 = vector.shape_cast %110 : vector<1x1x8x8xf32> to vector<8x8xf32>
    %cst_96 = arith.constant dense<0.000000e+00> : vector<8x288xf32>
    %112 = tpu.matmul %111, %109, %cst_96 {dimension_numbers = #tpu.dot_dimension_numbers<[1], [0], [0], [1], [0, 0, 1, 1], [], []>} : vector<8x8xf32>, vector<8x288xf32>, vector<8x288xf32> -> vector<8x288xf32>
    %113 = arith.addf %108, %112 : vector<8x288xf32>
    %114 = vector.extract_strided_slice %87 {offsets = [0, 20], sizes = [8, 288], strides = [1, 1]} : vector<8x342xf32> to vector<8x288xf32>
    %c1_97 = arith.constant 1 : index
    %c2_98 = arith.constant 2 : index
    %c0_99 = arith.constant 0 : index
    %c0_100 = arith.constant 0 : index
    %115 = vector.load %arg5[%c1_97, %c2_98, %c0_99, %c0_100] : memref<3x3x8x8xf32, #tpu.memory_space<vmem>>, vector<1x1x8x8xf32>
    %116 = vector.shape_cast %115 : vector<1x1x8x8xf32> to vector<8x8xf32>
    %cst_101 = arith.constant dense<0.000000e+00> : vector<8x288xf32>
    %117 = tpu.matmul %116, %114, %cst_101 {dimension_numbers = #tpu.dot_dimension_numbers<[1], [0], [0], [1], [0, 0, 1, 1], [], []>} : vector<8x8xf32>, vector<8x288xf32>, vector<8x288xf32> -> vector<8x288xf32>
    %118 = arith.addf %113, %117 : vector<8x288xf32>
    %119 = vector.extract_strided_slice %87 {offsets = [0, 36], sizes = [8, 288], strides = [1, 1]} : vector<8x342xf32> to vector<8x288xf32>
    %c2_102 = arith.constant 2 : index
    %c0_103 = arith.constant 0 : index
    %c0_104 = arith.constant 0 : index
    %c0_105 = arith.constant 0 : index
    %120 = vector.load %arg5[%c2_102, %c0_103, %c0_104, %c0_105] : memref<3x3x8x8xf32, #tpu.memory_space<vmem>>, vector<1x1x8x8xf32>
    %121 = vector.shape_cast %120 : vector<1x1x8x8xf32> to vector<8x8xf32>
    %cst_106 = arith.constant dense<0.000000e+00> : vector<8x288xf32>
    %122 = tpu.matmul %121, %119, %cst_106 {dimension_numbers = #tpu.dot_dimension_numbers<[1], [0], [0], [1], [0, 0, 1, 1], [], []>} : vector<8x8xf32>, vector<8x288xf32>, vector<8x288xf32> -> vector<8x288xf32>
    %123 = arith.addf %118, %122 : vector<8x288xf32>
    %124 = vector.extract_strided_slice %87 {offsets = [0, 37], sizes = [8, 288], strides = [1, 1]} : vector<8x342xf32> to vector<8x288xf32>
    %c2_107 = arith.constant 2 : index
    %c1_108 = arith.constant 1 : index
    %c0_109 = arith.constant 0 : index
    %c0_110 = arith.constant 0 : index
    %125 = vector.load %arg5[%c2_107, %c1_108, %c0_109, %c0_110] : memref<3x3x8x8xf32, #tpu.memory_space<vmem>>, vector<1x1x8x8xf32>
    %126 = vector.shape_cast %125 : vector<1x1x8x8xf32> to vector<8x8xf32>
    %cst_111 = arith.constant dense<0.000000e+00> : vector<8x288xf32>
    %127 = tpu.matmul %126, %124, %cst_111 {dimension_numbers = #tpu.dot_dimension_numbers<[1], [0], [0], [1], [0, 0, 1, 1], [], []>} : vector<8x8xf32>, vector<8x288xf32>, vector<8x288xf32> -> vector<8x288xf32>
    %128 = arith.addf %123, %127 : vector<8x288xf32>
    %129 = vector.extract_strided_slice %87 {offsets = [0, 38], sizes = [8, 288], strides = [1, 1]} : vector<8x342xf32> to vector<8x288xf32>
    %c2_112 = arith.constant 2 : index
    %c2_113 = arith.constant 2 : index
    %c0_114 = arith.constant 0 : index
    %c0_115 = arith.constant 0 : index
    %130 = vector.load %arg5[%c2_112, %c2_113, %c0_114, %c0_115] : memref<3x3x8x8xf32, #tpu.memory_space<vmem>>, vector<1x1x8x8xf32>
    %131 = vector.shape_cast %130 : vector<1x1x8x8xf32> to vector<8x8xf32>
    %cst_116 = arith.constant dense<0.000000e+00> : vector<8x288xf32>
    %132 = tpu.matmul %131, %129, %cst_116 {dimension_numbers = #tpu.dot_dimension_numbers<[1], [0], [0], [1], [0, 0, 1, 1], [], []>} : vector<8x8xf32>, vector<8x288xf32>, vector<8x288xf32> -> vector<8x288xf32>
    %133 = arith.addf %128, %132 : vector<8x288xf32>
    %c0_117 = arith.constant 0 : index
    %c0_118 = arith.constant 0 : index
    %134 = vector.load %arg6[%c0_117, %c0_118] : memref<8x1xf32, #tpu.memory_space<vmem>>, vector<8x1xf32>
    %135 = vector.broadcast %134 : vector<8x1xf32> to vector<8x288xf32>
    %136 = arith.mulf %133, %135 : vector<8x288xf32>
    %c0_119 = arith.constant 0 : index
    %c0_120 = arith.constant 0 : index
    %137 = vector.load %arg7[%c0_119, %c0_120] : memref<8x1xf32, #tpu.memory_space<vmem>>, vector<8x1xf32>
    %138 = vector.broadcast %137 : vector<8x1xf32> to vector<8x288xf32>
    %139 = arith.addf %136, %138 : vector<8x288xf32>
    %cst_121 = arith.constant 0.000000e+00 : f32
    %140 = vector.broadcast %cst_121 : f32 to vector<8x288xf32>
    %141 = arith.maximumf %139, %140 : vector<8x288xf32>
    %142 = vector.shape_cast %141 : vector<8x288xf32> to vector<8x16x18xf32>
    %143 = vector.extract_strided_slice %142 {offsets = [0, 0, 0], sizes = [8, 16, 16], strides = [1, 1, 1]} : vector<8x16x18xf32> to vector<8x16x16xf32>
    %144 = vector.shape_cast %143 : vector<8x16x16xf32> to vector<8x256xf32>
    %c0_122 = arith.constant 0 : index
    %c0_123 = arith.constant 0 : index
    %c0_124 = arith.constant 0 : index
    %145 = vector.load %arg8[%c0_122, %c0_123, %c0_124] : memref<1x8x256xf32, #tpu.memory_space<vmem>>, vector<1x8x256xf32>
    %146 = vector.shape_cast %145 : vector<1x8x256xf32> to vector<8x256xf32>
    %147 = vector.shape_cast %144 : vector<8x256xf32> to vector<1x8x256xf32>
    tpu.vector_store %arg8[%c0_122, %c0_123, %c0_124], %147 {strides = array<i32>} : memref<1x8x256xf32, #tpu.memory_space<vmem>>, vector<1x8x256xf32>,
    return
  }
  func.func @transform_0(%arg0: i32) -> (i32, i32, i32, i32) {
    %c0_i32 = arith.constant 0 : i32
    %c0_i32_0 = arith.constant 0 : i32
    %c0_i32_1 = arith.constant 0 : i32
    %c0_i32_2 = arith.constant 0 : i32
    return %arg0, %c0_i32, %c0_i32_0, %c0_i32_1 : i32, i32, i32, i32
  }
  func.func @transform_1(%arg0: i32) -> (i32, i32, i32, i32) {
    %c0_i32 = arith.constant 0 : i32
    %c0_i32_0 = arith.constant 0 : i32
    %c0_i32_1 = arith.constant 0 : i32
    %c0_i32_2 = arith.constant 0 : i32
    %c0_i32_3 = arith.constant 0 : i32
    return %c0_i32, %c0_i32_0, %c0_i32_1, %c0_i32_2 : i32, i32, i32, i32
  }
  func.func @transform_2(%arg0: i32) -> (i32, i32) {
    %c0_i32 = arith.constant 0 : i32
    %c0_i32_0 = arith.constant 0 : i32
    %c0_i32_1 = arith.constant 0 : i32
    return %c0_i32, %c0_i32_0 : i32, i32
  }
  func.func @transform_3(%arg0: i32) -> (i32, i32) {
    %c0_i32 = arith.constant 0 : i32
    %c0_i32_0 = arith.constant 0 : i32
    %c0_i32_1 = arith.constant 0 : i32
    return %c0_i32, %c0_i32_0 : i32, i32
  }
  func.func @transform_4(%arg0: i32) -> (i32, i32, i32, i32) {
    %c0_i32 = arith.constant 0 : i32
    %c0_i32_0 = arith.constant 0 : i32
    %c0_i32_1 = arith.constant 0 : i32
    %c0_i32_2 = arith.constant 0 : i32
    %c0_i32_3 = arith.constant 0 : i32
    return %c0_i32, %c0_i32_0, %c0_i32_1, %c0_i32_2 : i32, i32, i32, i32
  }
  func.func @transform_5(%arg0: i32) -> (i32, i32) {
    %c0_i32 = arith.constant 0 : i32
    %c0_i32_0 = arith.constant 0 : i32
    %c0_i32_1 = arith.constant 0 : i32
    return %c0_i32, %c0_i32_0 : i32, i32
  }
  func.func @transform_6(%arg0: i32) -> (i32, i32) {
    %c0_i32 = arith.constant 0 : i32
    %c0_i32_0 = arith.constant 0 : i32
    %c0_i32_1 = arith.constant 0 : i32
    return %c0_i32, %c0_i32_0 : i32, i32
  }
  func.func @transform_7(%arg0: i32) -> (i32, i32, i32) {
    %c0_i32 = arith.constant 0 : i32
    %c0_i32_0 = arith.constant 0 : i32
    %c0_i32_1 = arith.constant 0 : i32
    return %arg0, %c0_i32, %c0_i32_0 : i32, i32, i32
  }
}

</mosaic_0001>

<llo_original>
// kernel: tpu_custom_call.1
$region0: #{tpu_custom_call.1}
  #allocation0 [shape = 'u32[]', space=smem, size = 0x4, offset = 0x4, fixed_abs, tag = 'smem constant byte address 0x4 - core index']
  #allocation1 [shape = 'u32[72,128]{1,0:T(1,128)}', space=vmem, size = 0x9000, scoped, tag = 'internal scratch']
  #allocation2 [shape = 'f32[4,19,18]{2,1,0:T(8,128)}', space=vmem, size = 0xc000, scoped, tag = 'scratch operand']
  #allocation3 [shape = 'f32[8,342]{1,0:T(8,128)}', space=vmem, size = 0x3000, scoped, tag = 'scratch operand']
  %s0 = inlined_call_operand.hbm [shape: f32[2,4,16,16], index: 0, kind: input, shape index: {}]
  %s1 = inlined_call_operand.vmem [shape: f32[3,3,8,4], index: 1, kind: input, shape index: {}]
  %s2 = inlined_call_operand.vmem [shape: f32[8,1], index: 2, kind: input, shape index: {}]
  %s3 = inlined_call_operand.vmem [shape: f32[8,1], index: 3, kind: input, shape index: {}]
  %s4 = inlined_call_operand.vmem [shape: f32[3,3,8,8], index: 4, kind: input, shape index: {}]
  %s5 = inlined_call_operand.vmem [shape: f32[8,1], index: 5, kind: input, shape index: {}]
  %s6 = inlined_call_operand.vmem [shape: f32[8,1], index: 6, kind: input, shape index: {}]
  %s7 = inlined_call_operand.hbm [shape: f32[2,8,256], index: 7, kind: output, shape index: {}]
  %s8 = sld [smem:[#allocation0]]
  $region65: #{tpu_custom_call.1} parent=0
    _
  %s10 = ssub.s32 1, %s8
  %s11 = scalar_select 0, %s10, %s8
  $region1: #{tpu_custom_call.1} parent=0
    #allocation4 [shape = 'u8[65536]{0}', space=vmem, size = 0x10000, scoped, tag = 'input window, operand 0']
    #allocation5 [shape = 's32[2]{0}', space=sflag, size = 0x8, scoped, tag = 'scoped memory for tpu_custom_call.1']
    #allocation6 [shape = 's32[2]{0}', space=sflag, size = 0x8, scoped, tag = 'scoped memory for tpu_custom_call.1']
    #allocation7 [shape = 'u8[16384]{0}', space=vmem, size = 0x4000, scoped, tag = 'output window, operand 0']
    %12 = vsyncpa [#allocation5], 0
    %s13 = scalar_lea.sflag [#allocation5], 1
    %14 = vsyncpa %s13, 0
    %15 = vsyncpa [#allocation6], 0
    %s16 = scalar_lea.sflag [#allocation6], 1
    %17 = vsyncpa %s16, 0
    loop: start=0, step=1, limit=4
    $region2: #{tpu_custom_call.1} parent=1 // loop_pre_header
      _
    $region3: #{tpu_custom_call.1} parent=1 // loop_header
      %s19 = sphi 0, %s23
      %p20 = scmp.ge.s32.totalorder %s19, 4
      %s29 = sphi 0, %s31
      %s32 = sphi 0, %s29
      %s33 = sphi 0, %s32
      %s49 = sphi 0, %s33
      %s53 = sphi 0, %s53
      %s55 = sphi 0, %s53
      %s56 = sphi 0, %s55
      %s70 = sphi 0, %s56
      %s74 = sphi 0, %s74
      %s76 = sphi 0, %s74
      %s77 = sphi 0, %s76
      %s91 = sphi 0, %s77
      %s95 = sphi 0, %s95
      %s97 = sphi 0, %s95
      %s98 = sphi 0, %s97
      %s112 = sphi 0, %s98
      %s116 = sphi 0, %s116
      %s118 = sphi 0, %s116
      %s119 = sphi 0, %s118
      %s133 = sphi 0, %s119
      %s137 = sphi 0, %s137
      %s139 = sphi 0, %s137
      %s140 = sphi 0, %s139
      %s154 = sphi 0, %s140
      %s158 = sphi 0, %s158
      %s160 = sphi 0, %s158
      %s161 = sphi 0, %s160
      %s175 = sphi 0, %s161
      %s181 = sphi 0, %s183
      %s184 = sphi 0, %s181
      %s185 = sphi 0, %s184
      %s201 = sphi 0, %s185
    $region4: #{tpu_custom_call.1} parent=1 // loop_header_branch
      %22 = sbr.rel (%p20) target = $region8
    $region5: #{tpu_custom_call.1} parent=1 // loop_body
      %s24 = ssub.s32 %s19, 1
      %s25 = ssub.s32 %s19, 2
      %s26 = sadd.s32 %s19, 1
      %s27 = ssub.s32 %s19, %s26
      %p28 = scmp.eq.s32.totalorder %s27, 0
      %s30 = sadd.s32 %s29, 1
      %s31 = scalar_select %p28, %s29, %s30
      %p34 = pneg %p28
      %p35 = scmp.eq.s32.totalorder %s19, 1
      %p36 = por %p34, %p35
      %p37 = scmp.ne.s32.totalorder %s29, %s32
      %p38 = scmp.eq.s32.totalorder %s19, 0
      %p39 = por %p37, %p38
      %p40 = scmp.ne.s32.totalorder %s29, %s32
      %p41 = scmp.eq.s32.totalorder %s24, 1
      %p42 = por %p40, %p41
      %p43 = scmp.ne.s32.totalorder %s32, %s33
      %p44 = scmp.eq.s32.totalorder %s24, 0
      %p45 = por %p43, %p44
      %p46 = scmp.ne.s32.totalorder %s32, %s33
      %p47 = scmp.eq.s32.totalorder %s25, 1
      %p48 = por %p46, %p47
      %p50 = scmp.ne.s32.totalorder %s33, %s49
      %p51 = scmp.eq.s32.totalorder %s25, 0
      %p52 = por %p50, %p51
      %s54 = sadd.s32 %s53, 1
      %p57 = scmp.eq.s32.totalorder %s19, 1
      %p58 = scmp.ne.s32.totalorder %s53, %s55
      %p59 = scmp.eq.s32.totalorder %s19, 0
      %p60 = por %p58, %p59
      %p61 = scmp.ne.s32.totalorder %s53, %s55
      %p62 = scmp.eq.s32.totalorder %s24, 1
      %p63 = por %p61, %p62
      %p64 = scmp.ne.s32.totalorder %s55, %s56
      %p65 = scmp.eq.s32.totalorder %s24, 0
      %p66 = por %p64, %p65
      %p67 = scmp.ne.s32.totalorder %s55, %s56
      %p68 = scmp.eq.s32.totalorder %s25, 1
      %p69 = por %p67, %p68
      %p71 = scmp.ne.s32.totalorder %s56, %s70
      %p72 = scmp.eq.s32.totalorder %s25, 0
      %p73 = por %p71, %p72
      %s75 = sadd.s32 %s74, 1
      %p78 = scmp.eq.s32.totalorder %s19, 1
      %p79 = scmp.ne.s32.totalorder %s74, %s76
      %p80 = scmp.eq.s32.totalorder %s19, 0
      %p81 = por %p79, %p80
      %p82 = scmp.ne.s32.totalorder %s74, %s76
      %p83 = scmp.eq.s32.totalorder %s24, 1
      %p84 = por %p82, %p83
      %p85 = scmp.ne.s32.totalorder %s76, %s77
      %p86 = scmp.eq.s32.totalorder %s24, 0
      %p87 = por %p85, %p86
      %p88 = scmp.ne.s32.totalorder %s76, %s77
      %p89 = scmp.eq.s32.totalorder %s25, 1
      %p90 = por %p88, %p89
      %p92 = scmp.ne.s32.totalorder %s77, %s91
      %p93 = scmp.eq.s32.totalorder %s25, 0
      %p94 = por %p92, %p93
      %s96 = sadd.s32 %s95, 1
      %p99 = scmp.eq.s32.totalorder %s19, 1
      %p100 = scmp.ne.s32.totalorder %s95, %s97
      %p101 = scmp.eq.s32.totalorder %s19, 0
      %p102 = por %p100, %p101
      %p103 = scmp.ne.s32.totalorder %s95, %s97
      %p104 = scmp.eq.s32.totalorder %s24, 1
      %p105 = por %p103, %p104
      %p106 = scmp.ne.s32.totalorder %s97, %s98
      %p107 = scmp.eq.s32.totalorder %s24, 0
      %p108 = por %p106, %p107
      %p109 = scmp.ne.s32.totalorder %s97, %s98
      %p110 = scmp.eq.s32.totalorder %s25, 1
      %p111 = por %p109, %p110
      %p113 = scmp.ne.s32.totalorder %s98, %s112
      %p114 = scmp.eq.s32.totalorder %s25, 0
      %p115 = por %p113, %p114
      %s117 = sadd.s32 %s116, 1
      %p120 = scmp.eq.s32.totalorder %s19, 1
      %p121 = scmp.ne.s32.totalorder %s116, %s118
      %p122 = scmp.eq.s32.totalorder %s19, 0
      %p123 = por %p121, %p122
      %p124 = scmp.ne.s32.totalorder %s116, %s118
      %p125 = scmp.eq.s32.totalorder %s24, 1
      %p126 = por %p124, %p125
      %p127 = scmp.ne.s32.totalorder %s118, %s119
      %p128 = scmp.eq.s32.totalorder %s24, 0
      %p129 = por %p127, %p128
      %p130 = scmp.ne.s32.totalorder %s118, %s119
      %p131 = scmp.eq.s32.totalorder %s25, 1
      %p132 = por %p130, %p131
      %p134 = scmp.ne.s32.totalorder %s119, %s133
      %p135 = scmp.eq.s32.totalorder %s25, 0
      %p136 = por %p134, %p135
      %s138 = sadd.s32 %s137, 1
      %p141 = scmp.eq.s32.totalorder %s19, 1
      %p142 = scmp.ne.s32.totalorder %s137, %s139
      %p143 = scmp.eq.s32.totalorder %s19, 0
      %p144 = por %p142, %p143
      %p145 = scmp.ne.s32.totalorder %s137, %s139
      %p146 = scmp.eq.s32.totalorder %s24, 1
      %p147 = por %p145, %p146
      %p148 = scmp.ne.s32.totalorder %s139, %s140
      %p149 = scmp.eq.s32.totalorder %s24, 0
      %p150 = por %p148, %p149
      %p151 = scmp.ne.s32.totalorder %s139, %s140
      %p152 = scmp.eq.s32.totalorder %s25, 1
      %p153 = por %p151, %p152
      %p155 = scmp.ne.s32.totalorder %s140, %s154
      %p156 = scmp.eq.s32.totalorder %s25, 0
      %p157 = por %p155, %p156
      %s159 = sadd.s32 %s158, 1
      %p162 = scmp.eq.s32.totalorder %s19, 1
      %p163 = scmp.ne.s32.totalorder %s158, %s160
      %p164 = scmp.eq.s32.totalorder %s19, 0
      %p165 = por %p163, %p164
      %p166 = scmp.ne.s32.totalorder %s158, %s160
      %p167 = scmp.eq.s32.totalorder %s24, 1
      %p168 = por %p166, %p167
      %p169 = scmp.ne.s32.totalorder %s160, %s161
      %p170 = scmp.eq.s32.totalorder %s24, 0
      %p171 = por %p169, %p170
      %p172 = scmp.ne.s32.totalorder %s160, %s161
      %p173 = scmp.eq.s32.totalorder %s25, 1
      %p174 = por %p172, %p173
      %p176 = scmp.ne.s32.totalorder %s161, %s175
      %p177 = scmp.eq.s32.totalorder %s25, 0
      %p178 = por %p176, %p177
      %s179 = ssub.s32 %s19, %s26
      %p180 = scmp.eq.s32.totalorder %s179, 0
      %s182 = sadd.s32 %s181, 1
      %s183 = scalar_select %p180, %s181, %s182
      %p186 = pneg %p180
      %p187 = scmp.eq.s32.totalorder %s19, 1
      %p188 = por %p186, %p187
      %p189 = scmp.ne.s32.totalorder %s181, %s184
      %p190 = scmp.eq.s32.totalorder %s19, 0
      %p191 = por %p189, %p190
      %p192 = scmp.ne.s32.totalorder %s181, %s184
      %p193 = scmp.eq.s32.totalorder %s24, 1
      %p194 = por %p192, %p193
      %p195 = scmp.ne.s32.totalorder %s184, %s185
      %p196 = scmp.eq.s32.totalorder %s24, 0
      %p197 = por %p195, %p196
      %p198 = scmp.ne.s32.totalorder %s184, %s185
      %p199 = scmp.eq.s32.totalorder %s25, 1
      %p200 = por %p198, %p199
      %p202 = scmp.ne.s32.totalorder %s185, %s201
      %p203 = scmp.eq.s32.totalorder %s25, 0
      %p204 = por %p202, %p203
      %p205 = scmp.le.s32.totalorder 1, %s19
      %p206 = scmp.lt.s32.totalorder %s19, 3
      %p207 = pnand %p205, %p206
      %p208 = pneg %p207
      // Predicated region
      $region9: #{tpu_custom_call.1} parent=5 // pred_check
        _
      $region10: #{tpu_custom_call.1} parent=5 // pred_check_branch
        %210 = sbr.rel (%p207) target = $region12
      $region11: #{tpu_custom_call.1} parent=5 // pred_region
        %s211 = ssub.s32 %s19, 1
        // Predicated region
        $region13: #{tpu_custom_call.1} parent=11 // pred_check
          %p212 = pneg %p66
        $region14: #{tpu_custom_call.1} parent=11 // pred_check_branch
          %214 = sbr.rel (%p212) target = $region16
        $region15: #{tpu_custom_call.1} parent=11 // pred_region
          _
        $region16: #{tpu_custom_call.1} parent=11 // pred_fallthru
          _
        // Predicated region
        $region17: #{tpu_custom_call.1} parent=11 // pred_check
          %p215 = pneg %p87
        $region18: #{tpu_custom_call.1} parent=11 // pred_check_branch
          %217 = sbr.rel (%p215) target = $region20
        $region19: #{tpu_custom_call.1} parent=11 // pred_region
          _
        $region20: #{tpu_custom_call.1} parent=11 // pred_fallthru
          _
        // Predicated region
        $region21: #{tpu_custom_call.1} parent=11 // pred_check
          %p218 = pneg %p108
        $region22: #{tpu_custom_call.1} parent=11 // pred_check_branch
          %220 = sbr.rel (%p218) target = $region24
        $region23: #{tpu_custom_call.1} parent=11 // pred_region
          _
        $region24: #{tpu_custom_call.1} parent=11 // pred_fallthru
          _
        // Predicated region
        $region25: #{tpu_custom_call.1} parent=11 // pred_check
          %p221 = pneg %p129
        $region26: #{tpu_custom_call.1} parent=11 // pred_check_branch
          %223 = sbr.rel (%p221) target = $region28
        $region27: #{tpu_custom_call.1} parent=11 // pred_region
          _
        $region28: #{tpu_custom_call.1} parent=11 // pred_fallthru
          _
        // Predicated region
        $region29: #{tpu_custom_call.1} parent=11 // pred_check
          %p224 = pneg %p150
        $region30: #{tpu_custom_call.1} parent=11 // pred_check_branch
          %226 = sbr.rel (%p224) target = $region32
        $region31: #{tpu_custom_call.1} parent=11 // pred_region
          _
        $region32: #{tpu_custom_call.1} parent=11 // pred_fallthru
          _
        // Predicated region
        $region33: #{tpu_custom_call.1} parent=11 // pred_check
          %p227 = pneg %p171
        $region34: #{tpu_custom_call.1} parent=11 // pred_check_branch
          %229 = sbr.rel (%p227) target = $region36
        $region35: #{tpu_custom_call.1} parent=11 // pred_region
          _
        $region36: #{tpu_custom_call.1} parent=11 // pred_fallthru
          _
      $region12: #{tpu_custom_call.1} parent=5 // pred_fallthru
        _
      %p230 = scmp.lt.s32.totalorder %s19, 2
      // Predicated region
      $region37: #{tpu_custom_call.1} parent=5 // pred_check
        %p231 = pneg %p230
      $region38: #{tpu_custom_call.1} parent=5 // pred_check_branch
        %233 = sbr.rel (%p231) target = $region40
      $region39: #{tpu_custom_call.1} parent=5 // pred_region
        // Predicated region
        $region41: #{tpu_custom_call.1} parent=39 // pred_check
          %p234 = pneg %p39
        $region42: #{tpu_custom_call.1} parent=39 // pred_check_branch
          %236 = sbr.rel (%p234) target = $region44
        $region43: #{tpu_custom_call.1} parent=39 // pred_region
          %s237 = sand.u32 %s29, 1
          %s238 = scalar_lea.sflag [#allocation5], %s237
          %s239 = sand.u32 %s29, 1
          %s240 = smul.addr %s239, 64
          %s241 = scalar_lea.vmem [#allocation4], %s240
          %243 = vsyncadd %s238, 0
          %s244 = smul.addr %s19, 8
          %s245 = smul.addr %s244, 8
          %s246 = scalar_lea.hbm %s0, %s245
          %s247 = sshll.u32 %s246, 4
          %s248 = int_to_ptr.hbm [resolvable:$true] %s247
          %s249 = sshll.u32 %s241, 4
          %s250 = int_to_ptr.vmem [resolvable:$true] %s249
          %255 = dma.hbm_to_vmem [thread:$0]  %s248, 1024, %s250, %s238, 128, 128, 8
        $region44: #{tpu_custom_call.1} parent=39 // pred_fallthru
          _
      $region40: #{tpu_custom_call.1} parent=5 // pred_fallthru
        _
      %p256 = scmp.le.s32.totalorder 1, %s19
      %p257 = scmp.lt.s32.totalorder %s19, 3
      %p258 = pnand %p256, %p257
      %p259 = pneg %p258
      // Predicated region
      $region45: #{tpu_custom_call.1} parent=5 // pred_check
        _
      $region46: #{tpu_custom_call.1} parent=5 // pred_check_branch
        %261 = sbr.rel (%p258) target = $region48
      $region47: #{tpu_custom_call.1} parent=5 // pred_region
        %s262 = ssub.s32 %s19, 1
        %s263 = sand.u32 %s32, 1
        %s264 = scalar_lea.sflag [#allocation5], %s263
        %s265 = sand.u32 %s32, 1
        %s266 = smul.addr %s265, 64
        %s267 = scalar_lea.vmem [#allocation4], %s266
        // Predicated region
        $region49: #{tpu_custom_call.1} parent=47 // pred_check
          %p268 = pneg %p45
        $region50: #{tpu_custom_call.1} parent=47 // pred_check_branch
          %270 = sbr.rel (%p268) target = $region52
        $region51: #{tpu_custom_call.1} parent=47 // pred_region
          %272 = dma.done %s264, 1024
        $region52: #{tpu_custom_call.1} parent=47 // pred_fallthru
          _
        %s273 = sand.u32 %s32, 1
        %s274 = scalar_lea.sflag [#allocation5], %s273
        %s275 = sand.u32 %s32, 1
        %s276 = smul.addr %s275, 64
        %s277 = scalar_lea.vmem [#allocation4], %s276
        %p278 = pneg %p45
        %p279 = pneg %p42
        %p280 = pneg %p66
        %p281 = pneg %p63
        %p282 = pneg %p87
        %p283 = pneg %p84
        %p284 = pneg %p108
        %p285 = pneg %p105
        %p286 = pneg %p129
        %p287 = pneg %p126
        %p288 = pneg %p150
        %p289 = pneg %p147
        %p290 = pneg %p171
        %p291 = pneg %p168
        %p292 = pneg %p197
        %p293 = pneg %p194
        %s294 = sand.u32 %s184, 1
        %s295 = scalar_lea.sflag [#allocation6], %s294
        %s296 = sand.u32 %s184, 1
        %s297 = smul.addr %s296, 16
        %s298 = scalar_lea.vmem [#allocation7], %s297
        %vm299 = vcmask 146432
        %300 = vst.msk [vmem:[#allocation2] sm:$0xff] %vm299, 0.0
        %301 = vst.msk [vmem:[#allocation2 + $0x8] sm:$0xff] %vm299, 0.0
        %vm302 = vcmask 141312
        %303 = vst.msk [vmem:[#allocation2 + $0x10] sm:$0x7] %vm302, 0.0
        %304 = vst.msk [vmem:[#allocation2 + $0x18] sm:$0xff] %vm299, 0.0
        %305 = vst.msk [vmem:[#allocation2 + $0x20] sm:$0xff] %vm299, 0.0
        %306 = vst.msk [vmem:[#allocation2 + $0x28] sm:$0x7] %vm302, 0.0
        %307 = vst.msk [vmem:[#allocation2 + $0x30] sm:$0xff] %vm299, 0.0
        %308 = vst.msk [vmem:[#allocation2 + $0x38] sm:$0xff] %vm299, 0.0
        %309 = vst.msk [vmem:[#allocation2 + $0x40] sm:$0x7] %vm302, 0.0
        %310 = vst.msk [vmem:[#allocation2 + $0x48] sm:$0xff] %vm299, 0.0
        %311 = vst.msk [vmem:[#allocation2 + $0x50] sm:$0xff] %vm299, 0.0
        %312 = vst.msk [vmem:[#allocation2 + $0x58] sm:$0x7] %vm302, 0.0
        %v313 = vld [vmem:[%s267] sm:$0xff]
        %v314 = vld [vmem:[%s267 + $0x8] sm:$0xff]
        %v315 = vld [vmem:[%s267 + $0x10] sm:$0xff]
        %v316 = vld [vmem:[%s267 + $0x18] sm:$0xff]
        %v317 = vld [vmem:[%s267 + $0x20] sm:$0xff]
        %v318 = vld [vmem:[%s267 + $0x28] sm:$0xff]
        %v319 = vld [vmem:[%s267 + $0x30] sm:$0xff]
        %v320 = vld [vmem:[%s267 + $0x38] sm:$0xff]
        %329 = vrot.lane.b32.xlu0 %v313, 1
        %v330 = vpop.permute.xlu0 %329
        %331 = vrot.lane.b32.xlu0 %v314, 1
        %v332 = vpop.permute.xlu0 %331
        %333 = vrot.lane.b32.xlu0 %v315, 1
        %v334 = vpop.permute.xlu0 %333
        %335 = vrot.lane.b32.xlu0 %v316, 1
        %v336 = vpop.permute.xlu0 %335
        %337 = vrot.lane.b32.xlu0 %v317, 1
        %v338 = vpop.permute.xlu0 %337
        %339 = vrot.lane.b32.xlu0 %v318, 1
        %v340 = vpop.permute.xlu0 %339
        %341 = vrot.lane.b32.xlu0 %v319, 1
        %v342 = vpop.permute.xlu0 %341
        %343 = vrot.lane.b32.xlu0 %v320, 1
        %v344 = vpop.permute.xlu0 %343
        %vm353 = vcmask 138248
        %354 = vst.msk [vmem:[#allocation2 + $0x1] sm:$0xff] %vm353, %v330
        %355 = vst.msk [vmem:[#allocation2 + $0x9] sm:$0xff] %vm353, %v332
        %356 = vst.msk [vmem:[#allocation2 + $0x19] sm:$0xff] %vm353, %v334
        %357 = vst.msk [vmem:[#allocation2 + $0x21] sm:$0xff] %vm353, %v336
        %358 = vst.msk [vmem:[#allocation2 + $0x31] sm:$0xff] %vm353, %v338
        %359 = vst.msk [vmem:[#allocation2 + $0x39] sm:$0xff] %vm353, %v340
        %360 = vst.msk [vmem:[#allocation2 + $0x49] sm:$0xff] %vm353, %v342
        %361 = vst.msk [vmem:[#allocation2 + $0x51] sm:$0xff] %vm353, %v344
        %v362 = vld [vmem:[#allocation2] sm:$0xff]
        %v363 = vld [vmem:[#allocation2 + $0x8] sm:$0xff]
        %v364 = vld [vmem:[#allocation2 + $0x10] sm:$0x7]
        %v365 = vld [vmem:[#allocation2 + $0x18] sm:$0xff]
        %v366 = vld [vmem:[#allocation2 + $0x20] sm:$0xff]
        %v367 = vld [vmem:[#allocation2 + $0x28] sm:$0x7]
        %v368 = vld [vmem:[#allocation2 + $0x30] sm:$0xff]
        %v369 = vld [vmem:[#allocation2 + $0x38] sm:$0xff]
        %v370 = vld [vmem:[#allocation2 + $0x40] sm:$0x7]
        %v371 = vld [vmem:[#allocation2 + $0x48] sm:$0xff]
        %v372 = vld [vmem:[#allocation2 + $0x50] sm:$0xff]
        %v373 = vld [vmem:[#allocation2 + $0x58] sm:$0x7]
        %v374 = vrot.slane %v368, 4
        %vm375 = vcmask 1047556
        %v376 = vsel %vm375, %v374, %v362
        %v377 = vrot.slane %v362, 4
        %v378 = vsel %vm375, %v368, %v377
        %v380 = vunpack.c.l.s4 1983009808
        %v381 = vunpack.c.0.s8 %v380
        %v382 = vperm.slane %v376, %v381
        %v384 = vunpack.c.l.s4 1983009808
        %v385 = vunpack.c.0.s8 %v384
        %v386 = vperm.slane %v378, %v385
        %v387 = vrot.slane %v371, 4
        %v388 = vsel %vm375, %v387, %v365
        %v389 = vrot.slane %v365, 4
        %v390 = vsel %vm375, %v371, %v389
        %v392 = vunpack.c.l.s4 1983009808
        %v393 = vunpack.c.0.s8 %v392
        %v394 = vperm.slane %v388, %v393
        %v396 = vunpack.c.l.s4 1983009808
        %v397 = vunpack.c.0.s8 %v396
        %v398 = vperm.slane %v390, %v397
        %v399 = vrot.slane %v394, 4
        %v400 = vsel %vm375, %v399, %v382
        %v401 = vrot.slane %v382, 4
        %v402 = vsel %vm375, %v394, %v401
        %v404 = vunpack.c.l.s4 1934713408
        %v405 = vunpack.c.0.s8 %v404
        %v406 = vperm.slane %v400, %v405
        %v408 = vunpack.c.l.s4 1934713408
        %v409 = vunpack.c.0.s8 %v408
        %v410 = vperm.slane %v402, %v409
        %v411 = vrot.slane %v398, 4
        %v412 = vsel %vm375, %v411, %v386
        %v413 = vrot.slane %v386, 4
        %v414 = vsel %vm375, %v398, %v413
        %v416 = vunpack.c.l.s4 1934713408
        %v417 = vunpack.c.0.s8 %v416
        %v418 = vperm.slane %v412, %v417
        %v420 = vunpack.c.l.s4 1934713408
        %v421 = vunpack.c.0.s8 %v420
        %v422 = vperm.slane %v414, %v421
        %v423 = vrot.slane %v406, 4
        %v424 = vsel %vm375, 0.0, %v423
        %v425 = vrot.slane %v410, 4
        %v426 = vsel %vm375, 0.0, %v425
        %v427 = vrot.slane %v418, 4
        %v428 = vsel %vm375, 0.0, %v427
        %v429 = vrot.slane %v422, 4
        %v430 = vsel %vm375, 0.0, %v429
        %v431 = vrot.slane %v369, 4
        %v432 = vsel %vm375, %v431, %v363
        %v433 = vrot.slane %v363, 4
        %v434 = vsel %vm375, %v369, %v433
        %v436 = vunpack.c.l.s4 1983009808
        %v437 = vunpack.c.0.s8 %v436
        %v438 = vperm.slane %v432, %v437
        %v440 = vunpack.c.l.s4 1983009808
        %v441 = vunpack.c.0.s8 %v440
        %v442 = vperm.slane %v434, %v441
        %v443 = vrot.slane %v372, 4
        %v444 = vsel %vm375, %v443, %v366
        %v445 = vrot.slane %v366, 4
        %v446 = vsel %vm375, %v372, %v445
        %v448 = vunpack.c.l.s4 1983009808
        %v449 = vunpack.c.0.s8 %v448
        %v450 = vperm.slane %v444, %v449
        %v452 = vunpack.c.l.s4 1983009808
        %v453 = vunpack.c.0.s8 %v452
        %v454 = vperm.slane %v446, %v453
        %v455 = vrot.slane %v450, 4
        %v456 = vsel %vm375, %v455, %v438
        %v457 = vrot.slane %v438, 4
        %v458 = vsel %vm375, %v450, %v457
        %v460 = vunpack.c.l.s4 1934713408
        %v461 = vunpack.c.0.s8 %v460
        %v462 = vperm.slane %v456, %v461
        %v464 = vunpack.c.l.s4 1934713408
        %v465 = vunpack.c.0.s8 %v464
        %v466 = vperm.slane %v458, %v465
        %v467 = vrot.slane %v454, 4
        %v468 = vsel %vm375, %v467, %v442
        %v469 = vrot.slane %v442, 4
        %v470 = vsel %vm375, %v454, %v469
        %v472 = vunpack.c.l.s4 1934713408
        %v473 = vunpack.c.0.s8 %v472
        %v474 = vperm.slane %v468, %v473
        %v476 = vunpack.c.l.s4 1934713408
        %v477 = vunpack.c.0.s8 %v476
        %v478 = vperm.slane %v470, %v477
        %v479 = vrot.slane %v462, 4
        %v480 = vsel %vm375, 0.0, %v479
        %v481 = vrot.slane %v466, 4
        %v482 = vsel %vm375, 0.0, %v481
        %v483 = vrot.slane %v474, 4
        %v484 = vsel %vm375, 0.0, %v483
        %v485 = vrot.slane %v478, 4
        %v486 = vsel %vm375, 0.0, %v485
        %v487 = vrot.slane %v370, 4
        %v488 = vsel %vm375, %v487, %v364
        %v490 = vunpack.c.l.s4 1983009808
        %v491 = vunpack.c.0.s8 %v490
        %v492 = vperm.slane %v488, %v491
        %v493 = vrot.slane %v373, 4
        %v494 = vsel %vm375, %v493, %v367
        %v496 = vunpack.c.l.s4 1983009808
        %v497 = vunpack.c.0.s8 %v496
        %v498 = vperm.slane %v494, %v497
        %v499 = vrot.slane %v498, 4
        %v500 = vsel %vm375, %v499, %v492
        %v501 = vrot.slane %v492, 4
        %v502 = vsel %vm375, %v498, %v501
        %v504 = vunpack.c.l.s4 1934713408
        %v505 = vunpack.c.0.s8 %v504
        %v506 = vperm.slane %v500, %v505
        %v507 = vrot.slane %v506, 4
        %v508 = vsel %vm375, 0.0, %v507
        %v510 = vunpack.c.l.s4 1934713408
        %v511 = vunpack.c.0.s8 %v510
        %v512 = vperm.slane %v502, %v511
        %514 = vrot.lane.b32.xlu0 %v424, 18
        %v515 = vpop.permute.xlu0 %514
        %518 = vrot.lane.b32.xlu0 %v410, 36
        %v519 = vpop.permute.xlu0 %518
        %522 = vrot.lane.b32.xlu0 %v426, 54
        %v523 = vpop.permute.xlu0 %522
        %526 = vrot.lane.b32.xlu0 %v418, 72
        %v527 = vpop.permute.xlu0 %526
        %530 = vrot.lane.b32.xlu0 %v428, 90
        %v531 = vpop.permute.xlu0 %530
        %534 = vrot.lane.b32.xlu0 %v422, 108
        %v535 = vpop.permute.xlu0 %534
        %538 = vrot.lane.b32.xlu0 %v430, 126
        %v539 = vpop.permute.xlu0 %538
        %542 = vrot.lane.b32.xlu0 %v462, 16
        %v543 = vpop.permute.xlu0 %542
        %546 = vrot.lane.b32.xlu0 %v480, 34
        %v547 = vpop.permute.xlu0 %546
        %550 = vrot.lane.b32.xlu0 %v466, 52
        %v551 = vpop.permute.xlu0 %550
        %554 = vrot.lane.b32.xlu0 %v482, 70
        %v555 = vpop.permute.xlu0 %554
        %558 = vrot.lane.b32.xlu0 %v474, 88
        %v559 = vpop.permute.xlu0 %558
        %562 = vrot.lane.b32.xlu0 %v484, 106
        %v563 = vpop.permute.xlu0 %562
        %566 = vrot.lane.b32.xlu0 %v478, 124
        %v567 = vpop.permute.xlu0 %566
        %570 = vrot.lane.b32.xlu0 %v486, 14
        %v571 = vpop.permute.xlu0 %570
        %574 = vrot.lane.b32.xlu0 %v506, 32
        %v575 = vpop.permute.xlu0 %574
        %578 = vrot.lane.b32.xlu0 %v508, 50
        %v579 = vpop.permute.xlu0 %578
        %582 = vrot.lane.b32.xlu0 %v512, 68
        %v583 = vpop.permute.xlu0 %582
        %v585 = vsel %vm299, %v406, %v515
        %vm586 = vcmask 293888
        %v587 = vsel %vm586, %v585, %v519
        %vm588 = vcmask 441344
        %v589 = vsel %vm588, %v587, %v523
        %vm590 = vcmask 588800
        %v591 = vsel %vm590, %v589, %v527
        %vm592 = vcmask 736256
        %v593 = vsel %vm592, %v591, %v531
        %vm594 = vcmask 883712
        %v595 = vsel %vm594, %v593, %v535
        %vm596 = vcmask 1031168
        %v597 = vsel %vm596, %v595, %v539
        %vm598 = vcmask 130048
        %v599 = vsel %vm598, %v539, %v543
        %vm600 = vcmask 277504
        %v601 = vsel %vm600, %v599, %v547
        %vm602 = vcmask 424960
        %v603 = vsel %vm602, %v601, %v551
        %vm604 = vcmask 572416
        %v605 = vsel %vm604, %v603, %v555
        %vm606 = vcmask 719872
        %v607 = vsel %vm606, %v605, %v559
        %vm608 = vcmask 867328
        %v609 = vsel %vm608, %v607, %v563
        %vm610 = vcmask 1014784
        %v611 = vsel %vm610, %v609, %v567
        %vm612 = vcmask 113664
        %v613 = vsel %vm612, %v567, %v571
        %vm614 = vcmask 261120
        %v615 = vsel %vm614, %v613, %v575
        %vm616 = vcmask 408576
        %v617 = vsel %vm616, %v615, %v579
        %vm618 = vcmask 556032
        %v619 = vsel %vm618, %v617, %v583
        %v620 = vlaneseq
        %v621 = vand.u32 %v620, 127
        %v622 = vadd.s32 %v621, 128
        %v623 = vadd.s32 %v621, 256
        %vm624 = vcmp.lt.s32.totalorder %v621, 0
        %v625 = vsub.s32 0, %v621
        %v626 = vsel %vm624, %v625, %v621
        %v627 = vand.u32 %v626, 65535
        %v628 = vshrl.u32 %v626, 16
        %v630 = vmul.u32 %v627, 14564
        %v631 = vmul.u32 %v627, 58254
        %v632 = vmul.u32 %v628, 14564
        %v633 = vmul.u32 %v628, 58254
        %v634 = vshll.u32 %v631, 16
        %v635 = vshrl.u32 %v631, 16
        %v636 = vshll.u32 %v632, 16
        %v637 = vshrl.u32 %v632, 16
        %vm638 = vc.u32 %v630, %v634
        %v639 = vsel %vm638, 1, 0
        %v640 = vadd.s32 %v630, %v634
        %v641 = vadd.s32 %v633, %v639
        %vm642 = vc.u32 %v640, %v636
        %v643 = vsel %vm642, 1, 0
        %v644 = vadd.s32 %v640, %v636
        %v645 = vadd.s32 %v641, %v643
        %v646 = vadd.s32 %v645, %v635
        %v647 = vadd.s32 %v646, %v637
        %v648 = vshrl.u32 %v647, 4
        %v649 = vmul.u32 %v648, 18
        %v650 = vsub.s32 %v626, %v649
        %v651 = vsub.s32 0, %v650
        %v652 = vsel %vm624, %v651, %v650
        %vm653 = vcmp.lt.s32.totalorder %v622, 0
        %v654 = vsub.s32 0, %v622
        %v655 = vsel %vm653, %v654, %v622
        %v656 = vand.u32 %v655, 65535
        %v657 = vshrl.u32 %v655, 16
        %v659 = vmul.u32 %v656, 14564
        %v660 = vmul.u32 %v656, 58254
        %v661 = vmul.u32 %v657, 14564
        %v662 = vmul.u32 %v657, 58254
        %v663 = vshll.u32 %v660, 16
        %v664 = vshrl.u32 %v660, 16
        %v665 = vshll.u32 %v661, 16
        %v666 = vshrl.u32 %v661, 16
        %vm667 = vc.u32 %v659, %v663
        %v668 = vsel %vm667, 1, 0
        %v669 = vadd.s32 %v659, %v663
        %v670 = vadd.s32 %v662, %v668
        %vm671 = vc.u32 %v669, %v665
        %v672 = vsel %vm671, 1, 0
        %v673 = vadd.s32 %v669, %v665
        %v674 = vadd.s32 %v670, %v672
        %v675 = vadd.s32 %v674, %v664
        %v676 = vadd.s32 %v675, %v666
        %v677 = vshrl.u32 %v676, 4
        %v678 = vmul.u32 %v677, 18
        %v679 = vsub.s32 %v655, %v678
        %v680 = vsub.s32 0, %v679
        %v681 = vsel %vm653, %v680, %v679
        %vm682 = vcmp.lt.s32.totalorder %v623, 0
        %v683 = vsub.s32 0, %v623
        %v684 = vsel %vm682, %v683, %v623
        %v685 = vand.u32 %v684, 65535
        %v686 = vshrl.u32 %v684, 16
        %v688 = vmul.u32 %v685, 14564
        %v689 = vmul.u32 %v685, 58254
        %v690 = vmul.u32 %v686, 14564
        %v691 = vmul.u32 %v686, 58254
        %v692 = vshll.u32 %v689, 16
        %v693 = vshrl.u32 %v689, 16
        %v694 = vshll.u32 %v690, 16
        %v695 = vshrl.u32 %v690, 16
        %vm696 = vc.u32 %v688, %v692
        %v697 = vsel %vm696, 1, 0
        %v698 = vadd.s32 %v688, %v692
        %v699 = vadd.s32 %v691, %v697
        %vm700 = vc.u32 %v698, %v694
        %v701 = vsel %vm700, 1, 0
        %v702 = vadd.s32 %v698, %v694
        %v703 = vadd.s32 %v699, %v701
        %v704 = vadd.s32 %v703, %v693
        %v705 = vadd.s32 %v704, %v695
        %v706 = vshrl.u32 %v705, 4
        %v707 = vmul.u32 %v706, 18
        %v708 = vsub.s32 %v684, %v707
        %v709 = vsub.s32 0, %v708
        %v710 = vsel %vm682, %v709, %v708
        %vm711 = vcmp.ne.s32.totalorder %v652, 0
        %vm712 = vcmp.ne.s32.totalorder %v681, 0
        %vm713 = vcmp.ne.s32.totalorder %v710, 0
        %vm714 = vcmp.lt.s32.totalorder %v652, 0
        %vm715 = vcmp.lt.s32.totalorder %v681, 0
        %vm716 = vcmp.lt.s32.totalorder %v710, 0
        %vm717 = vmand %vm714, %vm711
        %vm718 = vmand %vm715, %vm712
        %vm719 = vmand %vm716, %vm713
        %v720 = vadd.s32 %v652, 18
        %v721 = vadd.s32 %v681, 18
        %v722 = vadd.s32 %v710, 18
        %v723 = vsel %vm717, %v720, %v652
        %v724 = vsel %vm718, %v721, %v681
        %v725 = vsel %vm719, %v722, %v710
        %vm726 = vcmp.lt.s32.totalorder %v723, 16
        %vm727 = vcmp.lt.s32.totalorder %v724, 16
        %vm728 = vcmp.lt.s32.totalorder %v725, 16
        %v729 = vld [vmem:[%s1] sm:$0xff]
        %s730 = scalar_lea.vmem %s1, 8
        %v731 = vld [vmem:[%s730] sm:$0xff]
        %735 = vrot.lane.b32.xlu0 %v597, 127
        %v736 = vpop.permute.xlu0 %735
        %737 = vrot.lane.b32.xlu0 %v611, 127
        %v738 = vpop.permute.xlu0 %737
        %739 = vrot.lane.b32.xlu0 %v619, 127
        %v740 = vpop.permute.xlu0 %739
        %vm741 = vcmask 1039360
        %v742 = vsel %vm741, %v736, %v738
        %v743 = vsel %vm741, %v738, %v740
        %vm744 = vcmask 31744
        %v746 = vsel %vm744, %v731, 0
        %vm748 = vcmask 1043456
        %v749 = vsel %vm748, %v742, 0
        %v751 = vsel %vm748, %v743, 0
        %v753 = vsel %vm748, %v740, 0
        %755 = vmatpush.msra.mxu0 0.0
        %756 = vmatpush.msra.mxu0 0.0
        %757 = vmatpush.msra.mxu0 0.0
        %758 = vmatpush.msra.mxu0 0.0
        %759 = vmatpush.msra.mxu0 0.0
        %760 = vmatpush.msra.mxu0 0.0
        %761 = vmatpush.msra.mxu0 0.0
        %762 = vmatpush.msra.mxu0 0.0
        %763 = vmatpush.msra.mxu0 0.0
        %764 = vmatpush.msra.mxu0 0.0
        %765 = vmatpush.msra.mxu0 0.0
        %766 = vmatpush.msra.mxu0 0.0
        %767 = vmatpush.msra.mxu0 0.0
        %768 = vmatpush.msra.mxu0 0.0
        %769 = vmatpush.msra.mxu0 0.0
        %770 = vmatpush.msra.mxu0 %v749
        %771 = vmatmul.f32.gmra.mxu0 %v746
        %v772 = vpop.f32.mrf.mxu0
        %v773 = vadd.f32 0.0, %v772
        %774 = vdwg.mxu0
        %775 = vmatpush.msra.mxu0 0.0
        %776 = vmatpush.msra.mxu0 0.0
        %777 = vmatpush.msra.mxu0 0.0
        %778 = vmatpush.msra.mxu0 0.0
        %779 = vmatpush.msra.mxu0 0.0
        %780 = vmatpush.msra.mxu0 0.0
        %781 = vmatpush.msra.mxu0 0.0
        %782 = vmatpush.msra.mxu0 0.0
        %783 = vmatpush.msra.mxu0 0.0
        %784 = vmatpush.msra.mxu0 0.0
        %785 = vmatpush.msra.mxu0 0.0
        %786 = vmatpush.msra.mxu0 0.0
        %787 = vmatpush.msra.mxu0 0.0
        %788 = vmatpush.msra.mxu0 0.0
        %789 = vmatpush.msra.mxu0 0.0
        %790 = vmatpush.msra.mxu0 %v751
        %791 = vmatmul.f32.gmra.mxu0 %v746
        %v792 = vpop.f32.mrf.mxu0
        %v793 = vadd.f32 0.0, %v792
        %794 = vdwg.mxu0
        %795 = vmatpush.msra.mxu0 0.0
        %796 = vmatpush.msra.mxu0 0.0
        %797 = vmatpush.msra.mxu0 0.0
        %798 = vmatpush.msra.mxu0 0.0
        %799 = vmatpush.msra.mxu0 0.0
        %800 = vmatpush.msra.mxu0 0.0
        %801 = vmatpush.msra.mxu0 0.0
        %802 = vmatpush.msra.mxu0 0.0
        %803 = vmatpush.msra.mxu0 0.0
        %804 = vmatpush.msra.mxu0 0.0
        %805 = vmatpush.msra.mxu0 0.0
        %806 = vmatpush.msra.mxu0 0.0
        %807 = vmatpush.msra.mxu0 0.0
        %808 = vmatpush.msra.mxu0 0.0
        %809 = vmatpush.msra.mxu0 0.0
        %810 = vmatpush.msra.mxu0 %v753
        %811 = vmatmul.f32.gmra.mxu0 %v746
        %v812 = vpop.f32.mrf.mxu0
        %v813 = vadd.f32 0.0, %v812
        %814 = vdwg.mxu0
        %v816 = vsel %vm744, %v729, 0
        %v818 = vsel %vm748, %v597, 0
        %v820 = vsel %vm748, %v611, 0
        %v822 = vsel %vm748, %v619, 0
        %824 = vmatpush.msra.mxu0 0.0
        %825 = vmatpush.msra.mxu0 0.0
        %826 = vmatpush.msra.mxu0 0.0
        %827 = vmatpush.msra.mxu0 0.0
        %828 = vmatpush.msra.mxu0 0.0
        %829 = vmatpush.msra.mxu0 0.0
        %830 = vmatpush.msra.mxu0 0.0
        %831 = vmatpush.msra.mxu0 0.0
        %832 = vmatpush.msra.mxu0 0.0
        %833 = vmatpush.msra.mxu0 0.0
        %834 = vmatpush.msra.mxu0 0.0
        %835 = vmatpush.msra.mxu0 0.0
        %836 = vmatpush.msra.mxu0 0.0
        %837 = vmatpush.msra.mxu0 0.0
        %838 = vmatpush.msra.mxu0 0.0
        %839 = vmatpush.msra.mxu0 %v818
        %840 = vmatmul.f32.gmra.mxu0 %v816
        %v841 = vpop.f32.mrf.mxu0
        %v842 = vadd.f32 %v773, %v841
        %843 = vdwg.mxu0
        %844 = vmatpush.msra.mxu0 0.0
        %845 = vmatpush.msra.mxu0 0.0
        %846 = vmatpush.msra.mxu0 0.0
        %847 = vmatpush.msra.mxu0 0.0
        %848 = vmatpush.msra.mxu0 0.0
        %849 = vmatpush.msra.mxu0 0.0
        %850 = vmatpush.msra.mxu0 0.0
        %851 = vmatpush.msra.mxu0 0.0
        %852 = vmatpush.msra.mxu0 0.0
        %853 = vmatpush.msra.mxu0 0.0
        %854 = vmatpush.msra.mxu0 0.0
        %855 = vmatpush.msra.mxu0 0.0
        %856 = vmatpush.msra.mxu0 0.0
        %857 = vmatpush.msra.mxu0 0.0
        %858 = vmatpush.msra.mxu0 0.0
        %859 = vmatpush.msra.mxu0 %v820
        %860 = vmatmul.f32.gmra.mxu0 %v816
        %v861 = vpop.f32.mrf.mxu0
        %v862 = vadd.f32 %v793, %v861
        %863 = vdwg.mxu0
        %864 = vmatpush.msra.mxu0 0.0
        %865 = vmatpush.msra.mxu0 0.0
        %866 = vmatpush.msra.mxu0 0.0
        %867 = vmatpush.msra.mxu0 0.0
        %868 = vmatpush.msra.mxu0 0.0
        %869 = vmatpush.msra.mxu0 0.0
        %870 = vmatpush.msra.mxu0 0.0
        %871 = vmatpush.msra.mxu0 0.0
        %872 = vmatpush.msra.mxu0 0.0
        %873 = vmatpush.msra.mxu0 0.0
        %874 = vmatpush.msra.mxu0 0.0
        %875 = vmatpush.msra.mxu0 0.0
        %876 = vmatpush.msra.mxu0 0.0
        %877 = vmatpush.msra.mxu0 0.0
        %878 = vmatpush.msra.mxu0 0.0
        %879 = vmatpush.msra.mxu0 %v822
        %880 = vmatmul.f32.gmra.mxu0 %v816
        %v881 = vpop.f32.mrf.mxu0
        %v882 = vadd.f32 %v813, %v881
        %883 = vdwg.mxu0
        %s884 = scalar_lea.vmem %s1, 16
        %v885 = vld [vmem:[%s884] sm:$0xff]
        %886 = vrot.lane.b32.xlu0 %v597, 126
        %v887 = vpop.permute.xlu0 %886
        %888 = vrot.lane.b32.xlu0 %v611, 126
        %v889 = vpop.permute.xlu0 %888
        %890 = vrot.lane.b32.xlu0 %v619, 126
        %v891 = vpop.permute.xlu0 %890
        %v892 = vsel %vm596, %v887, %v889
        %v893 = vsel %vm596, %v889, %v891
        %v895 = vsel %vm744, %v885, 0
        %v897 = vsel %vm748, %v892, 0
        %v899 = vsel %vm748, %v893, 0
        %v901 = vsel %vm748, %v891, 0
        %903 = vmatpush.msra.mxu0 0.0
        %904 = vmatpush.msra.mxu0 0.0
        %905 = vmatpush.msra.mxu0 0.0
        %906 = vmatpush.msra.mxu0 0.0
        %907 = vmatpush.msra.mxu0 0.0
        %908 = vmatpush.msra.mxu0 0.0
        %909 = vmatpush.msra.mxu0 0.0
        %910 = vmatpush.msra.mxu0 0.0
        %911 = vmatpush.msra.mxu0 0.0
        %912 = vmatpush.msra.mxu0 0.0
        %913 = vmatpush.msra.mxu0 0.0
        %914 = vmatpush.msra.mxu0 0.0
        %915 = vmatpush.msra.mxu0 0.0
        %916 = vmatpush.msra.mxu0 0.0
        %917 = vmatpush.msra.mxu0 0.0
        %918 = vmatpush.msra.mxu0 %v897
        %919 = vmatmul.f32.gmra.mxu0 %v895
        %v920 = vpop.f32.mrf.mxu0
        %v921 = vadd.f32 0.0, %v920
        %922 = vdwg.mxu0
        %923 = vmatpush.msra.mxu0 0.0
        %924 = vmatpush.msra.mxu0 0.0
        %925 = vmatpush.msra.mxu0 0.0
        %926 = vmatpush.msra.mxu0 0.0
        %927 = vmatpush.msra.mxu0 0.0
        %928 = vmatpush.msra.mxu0 0.0
        %929 = vmatpush.msra.mxu0 0.0
        %930 = vmatpush.msra.mxu0 0.0
        %931 = vmatpush.msra.mxu0 0.0
        %932 = vmatpush.msra.mxu0 0.0
        %933 = vmatpush.msra.mxu0 0.0
        %934 = vmatpush.msra.mxu0 0.0
        %935 = vmatpush.msra.mxu0 0.0
        %936 = vmatpush.msra.mxu0 0.0
        %937 = vmatpush.msra.mxu0 0.0
        %938 = vmatpush.msra.mxu0 %v899
        %939 = vmatmul.f32.gmra.mxu0 %v895
        %v940 = vpop.f32.mrf.mxu0
        %v941 = vadd.f32 0.0, %v940
        %942 = vdwg.mxu0
        %943 = vmatpush.msra.mxu0 0.0
        %944 = vmatpush.msra.mxu0 0.0
        %945 = vmatpush.msra.mxu0 0.0
        %946 = vmatpush.msra.mxu0 0.0
        %947 = vmatpush.msra.mxu0 0.0
        %948 = vmatpush.msra.mxu0 0.0
        %949 = vmatpush.msra.mxu0 0.0
        %950 = vmatpush.msra.mxu0 0.0
        %951 = vmatpush.msra.mxu0 0.0
        %952 = vmatpush.msra.mxu0 0.0
        %953 = vmatpush.msra.mxu0 0.0
        %954 = vmatpush.msra.mxu0 0.0
        %955 = vmatpush.msra.mxu0 0.0
        %956 = vmatpush.msra.mxu0 0.0
        %957 = vmatpush.msra.mxu0 0.0
        %958 = vmatpush.msra.mxu0 %v901
        %959 = vmatmul.f32.gmra.mxu0 %v895
        %v960 = vpop.f32.mrf.mxu0
        %v961 = vadd.f32 0.0, %v960
        %962 = vdwg.mxu0
        %v963 = vadd.f32 %v842, %v921
        %v964 = vadd.f32 %v862, %v941
        %v965 = vadd.f32 %v882, %v961
        %s966 = scalar_lea.vmem %s1, 24
        %v967 = vld [vmem:[%s966] sm:$0xff]
        %968 = vrot.lane.b32.xlu0 %v597, 110
        %v969 = vpop.permute.xlu0 %968
        %970 = vrot.lane.b32.xlu0 %v611, 110
        %v971 = vpop.permute.xlu0 %970
        %972 = vrot.lane.b32.xlu0 %v619, 110
        %v973 = vpop.permute.xlu0 %972
        %vm974 = vcmask 900096
        %v975 = vsel %vm974, %v969, %v971
        %v976 = vsel %vm974, %v971, %v973
        %v978 = vsel %vm744, %v967, 0
        %v980 = vsel %vm748, %v975, 0
        %v982 = vsel %vm748, %v976, 0
        %v984 = vsel %vm748, %v973, 0
        %986 = vmatpush.msra.mxu0 0.0
        %987 = vmatpush.msra.mxu0 0.0
        %988 = vmatpush.msra.mxu0 0.0
        %989 = vmatpush.msra.mxu0 0.0
        %990 = vmatpush.msra.mxu0 0.0
        %991 = vmatpush.msra.mxu0 0.0
        %992 = vmatpush.msra.mxu0 0.0
        %993 = vmatpush.msra.mxu0 0.0
        %994 = vmatpush.msra.mxu0 0.0
        %995 = vmatpush.msra.mxu0 0.0
        %996 = vmatpush.msra.mxu0 0.0
        %997 = vmatpush.msra.mxu0 0.0
        %998 = vmatpush.msra.mxu0 0.0
        %999 = vmatpush.msra.mxu0 0.0
        %1000 = vmatpush.msra.mxu0 0.0
        %1001 = vmatpush.msra.mxu0 %v980
        %1002 = vmatmul.f32.gmra.mxu0 %v978
        %v1003 = vpop.f32.mrf.mxu0
        %v1004 = vadd.f32 0.0, %v1003
        %1005 = vdwg.mxu0
        %1006 = vmatpush.msra.mxu0 0.0
        %1007 = vmatpush.msra.mxu0 0.0
        %1008 = vmatpush.msra.mxu0 0.0
        %1009 = vmatpush.msra.mxu0 0.0
        %1010 = vmatpush.msra.mxu0 0.0
        %1011 = vmatpush.msra.mxu0 0.0
        %1012 = vmatpush.msra.mxu0 0.0
        %1013 = vmatpush.msra.mxu0 0.0
        %1014 = vmatpush.msra.mxu0 0.0
        %1015 = vmatpush.msra.mxu0 0.0
        %1016 = vmatpush.msra.mxu0 0.0
        %1017 = vmatpush.msra.mxu0 0.0
        %1018 = vmatpush.msra.mxu0 0.0
        %1019 = vmatpush.msra.mxu0 0.0
        %1020 = vmatpush.msra.mxu0 0.0
        %1021 = vmatpush.msra.mxu0 %v982
        %1022 = vmatmul.f32.gmra.mxu0 %v978
        %v1023 = vpop.f32.mrf.mxu0
        %v1024 = vadd.f32 0.0, %v1023
        %1025 = vdwg.mxu0
        %1026 = vmatpush.msra.mxu0 0.0
        %1027 = vmatpush.msra.mxu0 0.0
        %1028 = vmatpush.msra.mxu0 0.0
        %1029 = vmatpush.msra.mxu0 0.0
        %1030 = vmatpush.msra.mxu0 0.0
        %1031 = vmatpush.msra.mxu0 0.0
        %1032 = vmatpush.msra.mxu0 0.0
        %1033 = vmatpush.msra.mxu0 0.0
        %1034 = vmatpush.msra.mxu0 0.0
        %1035 = vmatpush.msra.mxu0 0.0
        %1036 = vmatpush.msra.mxu0 0.0
        %1037 = vmatpush.msra.mxu0 0.0
        %1038 = vmatpush.msra.mxu0 0.0
        %1039 = vmatpush.msra.mxu0 0.0
        %1040 = vmatpush.msra.mxu0 0.0
        %1041 = vmatpush.msra.mxu0 %v984
        %1042 = vmatmul.f32.gmra.mxu0 %v978
        %v1043 = vpop.f32.mrf.mxu0
        %v1044 = vadd.f32 0.0, %v1043
        %1045 = vdwg.mxu0
        %v1046 = vadd.f32 %v963, %v1004
        %v1047 = vadd.f32 %v964, %v1024
        %v1048 = vadd.f32 %v965, %v1044
        %s1049 = scalar_lea.vmem %s1, 32
        %v1050 = vld [vmem:[%s1049] sm:$0xff]
        %1051 = vrot.lane.b32.xlu0 %v597, 109
        %v1052 = vpop.permute.xlu0 %1051
        %1053 = vrot.lane.b32.xlu0 %v611, 109
        %v1054 = vpop.permute.xlu0 %1053
        %1055 = vrot.lane.b32.xlu0 %v619, 109
        %v1056 = vpop.permute.xlu0 %1055
        %vm1057 = vcmask 891904
        %v1058 = vsel %vm1057, %v1052, %v1054
        %v1059 = vsel %vm1057, %v1054, %v1056
        %v1061 = vsel %vm744, %v1050, 0
        %v1063 = vsel %vm748, %v1058, 0
        %v1065 = vsel %vm748, %v1059, 0
        %v1067 = vsel %vm748, %v1056, 0
        %1069 = vmatpush.msra.mxu0 0.0
        %1070 = vmatpush.msra.mxu0 0.0
        %1071 = vmatpush.msra.mxu0 0.0
        %1072 = vmatpush.msra.mxu0 0.0
        %1073 = vmatpush.msra.mxu0 0.0
        %1074 = vmatpush.msra.mxu0 0.0
        %1075 = vmatpush.msra.mxu0 0.0
        %1076 = vmatpush.msra.mxu0 0.0
        %1077 = vmatpush.msra.mxu0 0.0
        %1078 = vmatpush.msra.mxu0 0.0
        %1079 = vmatpush.msra.mxu0 0.0
        %1080 = vmatpush.msra.mxu0 0.0
        %1081 = vmatpush.msra.mxu0 0.0
        %1082 = vmatpush.msra.mxu0 0.0
        %1083 = vmatpush.msra.mxu0 0.0
        %1084 = vmatpush.msra.mxu0 %v1063
        %1085 = vmatmul.f32.gmra.mxu0 %v1061
        %v1086 = vpop.f32.mrf.mxu0
        %v1087 = vadd.f32 0.0, %v1086
        %1088 = vdwg.mxu0
        %1089 = vmatpush.msra.mxu0 0.0
        %1090 = vmatpush.msra.mxu0 0.0
        %1091 = vmatpush.msra.mxu0 0.0
        %1092 = vmatpush.msra.mxu0 0.0
        %1093 = vmatpush.msra.mxu0 0.0
        %1094 = vmatpush.msra.mxu0 0.0
        %1095 = vmatpush.msra.mxu0 0.0
        %1096 = vmatpush.msra.mxu0 0.0
        %1097 = vmatpush.msra.mxu0 0.0
        %1098 = vmatpush.msra.mxu0 0.0
        %1099 = vmatpush.msra.mxu0 0.0
        %1100 = vmatpush.msra.mxu0 0.0
        %1101 = vmatpush.msra.mxu0 0.0
        %1102 = vmatpush.msra.mxu0 0.0
        %1103 = vmatpush.msra.mxu0 0.0
        %1104 = vmatpush.msra.mxu0 %v1065
        %1105 = vmatmul.f32.gmra.mxu0 %v1061
        %v1106 = vpop.f32.mrf.mxu0
        %v1107 = vadd.f32 0.0, %v1106
        %1108 = vdwg.mxu0
        %1109 = vmatpush.msra.mxu0 0.0
        %1110 = vmatpush.msra.mxu0 0.0
        %1111 = vmatpush.msra.mxu0 0.0
        %1112 = vmatpush.msra.mxu0 0.0
        %1113 = vmatpush.msra.mxu0 0.0
        %1114 = vmatpush.msra.mxu0 0.0
        %1115 = vmatpush.msra.mxu0 0.0
        %1116 = vmatpush.msra.mxu0 0.0
        %1117 = vmatpush.msra.mxu0 0.0
        %1118 = vmatpush.msra.mxu0 0.0
        %1119 = vmatpush.msra.mxu0 0.0
        %1120 = vmatpush.msra.mxu0 0.0
        %1121 = vmatpush.msra.mxu0 0.0
        %1122 = vmatpush.msra.mxu0 0.0
        %1123 = vmatpush.msra.mxu0 0.0
        %1124 = vmatpush.msra.mxu0 %v1067
        %1125 = vmatmul.f32.gmra.mxu0 %v1061
        %v1126 = vpop.f32.mrf.mxu0
        %v1127 = vadd.f32 0.0, %v1126
        %1128 = vdwg.mxu0
        %v1129 = vadd.f32 %v1046, %v1087
        %v1130 = vadd.f32 %v1047, %v1107
        %v1131 = vadd.f32 %v1048, %v1127
        %s1132 = scalar_lea.vmem %s1, 40
        %v1133 = vld [vmem:[%s1132] sm:$0xff]
        %1134 = vrot.lane.b32.xlu0 %v597, 108
        %v1135 = vpop.permute.xlu0 %1134
        %1136 = vrot.lane.b32.xlu0 %v611, 108
        %v1137 = vpop.permute.xlu0 %1136
        %1138 = vrot.lane.b32.xlu0 %v619, 108
        %v1139 = vpop.permute.xlu0 %1138
        %v1140 = vsel %vm594, %v1135, %v1137
        %v1141 = vsel %vm594, %v1137, %v1139
        %v1143 = vsel %vm744, %v1133, 0
        %v1145 = vsel %vm748, %v1140, 0
        %v1147 = vsel %vm748, %v1141, 0
        %v1149 = vsel %vm748, %v1139, 0
        %1151 = vmatpush.msra.mxu0 0.0
        %1152 = vmatpush.msra.mxu0 0.0
        %1153 = vmatpush.msra.mxu0 0.0
        %1154 = vmatpush.msra.mxu0 0.0
        %1155 = vmatpush.msra.mxu0 0.0
        %1156 = vmatpush.msra.mxu0 0.0
        %1157 = vmatpush.msra.mxu0 0.0
        %1158 = vmatpush.msra.mxu0 0.0
        %1159 = vmatpush.msra.mxu0 0.0
        %1160 = vmatpush.msra.mxu0 0.0
        %1161 = vmatpush.msra.mxu0 0.0
        %1162 = vmatpush.msra.mxu0 0.0
        %1163 = vmatpush.msra.mxu0 0.0
        %1164 = vmatpush.msra.mxu0 0.0
        %1165 = vmatpush.msra.mxu0 0.0
        %1166 = vmatpush.msra.mxu0 %v1145
        %1167 = vmatmul.f32.gmra.mxu0 %v1143
        %v1168 = vpop.f32.mrf.mxu0
        %v1169 = vadd.f32 0.0, %v1168
        %1170 = vdwg.mxu0
        %1171 = vmatpush.msra.mxu0 0.0
        %1172 = vmatpush.msra.mxu0 0.0
        %1173 = vmatpush.msra.mxu0 0.0
        %1174 = vmatpush.msra.mxu0 0.0
        %1175 = vmatpush.msra.mxu0 0.0
        %1176 = vmatpush.msra.mxu0 0.0
        %1177 = vmatpush.msra.mxu0 0.0
        %1178 = vmatpush.msra.mxu0 0.0
        %1179 = vmatpush.msra.mxu0 0.0
        %1180 = vmatpush.msra.mxu0 0.0
        %1181 = vmatpush.msra.mxu0 0.0
        %1182 = vmatpush.msra.mxu0 0.0
        %1183 = vmatpush.msra.mxu0 0.0
        %1184 = vmatpush.msra.mxu0 0.0
        %1185 = vmatpush.msra.mxu0 0.0
        %1186 = vmatpush.msra.mxu0 %v1147
        %1187 = vmatmul.f32.gmra.mxu0 %v1143
        %v1188 = vpop.f32.mrf.mxu0
        %v1189 = vadd.f32 0.0, %v1188
        %1190 = vdwg.mxu0
        %1191 = vmatpush.msra.mxu0 0.0
        %1192 = vmatpush.msra.mxu0 0.0
        %1193 = vmatpush.msra.mxu0 0.0
        %1194 = vmatpush.msra.mxu0 0.0
        %1195 = vmatpush.msra.mxu0 0.0
        %1196 = vmatpush.msra.mxu0 0.0
        %1197 = vmatpush.msra.mxu0 0.0
        %1198 = vmatpush.msra.mxu0 0.0
        %1199 = vmatpush.msra.mxu0 0.0
        %1200 = vmatpush.msra.mxu0 0.0
        %1201 = vmatpush.msra.mxu0 0.0
        %1202 = vmatpush.msra.mxu0 0.0
        %1203 = vmatpush.msra.mxu0 0.0
        %1204 = vmatpush.msra.mxu0 0.0
        %1205 = vmatpush.msra.mxu0 0.0
        %1206 = vmatpush.msra.mxu0 %v1149
        %1207 = vmatmul.f32.gmra.mxu0 %v1143
        %v1208 = vpop.f32.mrf.mxu0
        %v1209 = vadd.f32 0.0, %v1208
        %1210 = vdwg.mxu0
        %v1211 = vadd.f32 %v1129, %v1169
        %v1212 = vadd.f32 %v1130, %v1189
        %v1213 = vadd.f32 %v1131, %v1209
        %s1214 = scalar_lea.vmem %s1, 48
        %v1215 = vld [vmem:[%s1214] sm:$0xff]
        %1216 = vrot.lane.b32.xlu0 %v597, 92
        %v1217 = vpop.permute.xlu0 %1216
        %1218 = vrot.lane.b32.xlu0 %v611, 92
        %v1219 = vpop.permute.xlu0 %1218
        %1220 = vrot.lane.b32.xlu0 %v619, 92
        %v1221 = vpop.permute.xlu0 %1220
        %vm1222 = vcmask 752640
        %v1223 = vsel %vm1222, %v1217, %v1219
        %v1224 = vsel %vm1222, %v1219, %v1221
        %v1226 = vsel %vm744, %v1215, 0
        %v1228 = vsel %vm748, %v1223, 0
        %v1230 = vsel %vm748, %v1224, 0
        %v1232 = vsel %vm748, %v1221, 0
        %1234 = vmatpush.msra.mxu0 0.0
        %1235 = vmatpush.msra.mxu0 0.0
        %1236 = vmatpush.msra.mxu0 0.0
        %1237 = vmatpush.msra.mxu0 0.0
        %1238 = vmatpush.msra.mxu0 0.0
        %1239 = vmatpush.msra.mxu0 0.0
        %1240 = vmatpush.msra.mxu0 0.0
        %1241 = vmatpush.msra.mxu0 0.0
        %1242 = vmatpush.msra.mxu0 0.0
        %1243 = vmatpush.msra.mxu0 0.0
        %1244 = vmatpush.msra.mxu0 0.0
        %1245 = vmatpush.msra.mxu0 0.0
        %1246 = vmatpush.msra.mxu0 0.0
        %1247 = vmatpush.msra.mxu0 0.0
        %1248 = vmatpush.msra.mxu0 0.0
        %1249 = vmatpush.msra.mxu0 %v1228
        %1250 = vmatmul.f32.gmra.mxu0 %v1226
        %v1251 = vpop.f32.mrf.mxu0
        %v1252 = vadd.f32 0.0, %v1251
        %1253 = vdwg.mxu0
        %1254 = vmatpush.msra.mxu0 0.0
        %1255 = vmatpush.msra.mxu0 0.0
        %1256 = vmatpush.msra.mxu0 0.0
        %1257 = vmatpush.msra.mxu0 0.0
        %1258 = vmatpush.msra.mxu0 0.0
        %1259 = vmatpush.msra.mxu0 0.0
        %1260 = vmatpush.msra.mxu0 0.0
        %1261 = vmatpush.msra.mxu0 0.0
        %1262 = vmatpush.msra.mxu0 0.0
        %1263 = vmatpush.msra.mxu0 0.0
        %1264 = vmatpush.msra.mxu0 0.0
        %1265 = vmatpush.msra.mxu0 0.0
        %1266 = vmatpush.msra.mxu0 0.0
        %1267 = vmatpush.msra.mxu0 0.0
        %1268 = vmatpush.msra.mxu0 0.0
        %1269 = vmatpush.msra.mxu0 %v1230
        %1270 = vmatmul.f32.gmra.mxu0 %v1226
        %v1271 = vpop.f32.mrf.mxu0
        %v1272 = vadd.f32 0.0, %v1271
        %1273 = vdwg.mxu0
        %1274 = vmatpush.msra.mxu0 0.0
        %1275 = vmatpush.msra.mxu0 0.0
        %1276 = vmatpush.msra.mxu0 0.0
        %1277 = vmatpush.msra.mxu0 0.0
        %1278 = vmatpush.msra.mxu0 0.0
        %1279 = vmatpush.msra.mxu0 0.0
        %1280 = vmatpush.msra.mxu0 0.0
        %1281 = vmatpush.msra.mxu0 0.0
        %1282 = vmatpush.msra.mxu0 0.0
        %1283 = vmatpush.msra.mxu0 0.0
        %1284 = vmatpush.msra.mxu0 0.0
        %1285 = vmatpush.msra.mxu0 0.0
        %1286 = vmatpush.msra.mxu0 0.0
        %1287 = vmatpush.msra.mxu0 0.0
        %1288 = vmatpush.msra.mxu0 0.0
        %1289 = vmatpush.msra.mxu0 %v1232
        %1290 = vmatmul.f32.gmra.mxu0 %v1226
        %v1291 = vpop.f32.mrf.mxu0
        %v1292 = vadd.f32 0.0, %v1291
        %1293 = vdwg.mxu0
        %v1294 = vadd.f32 %v1211, %v1252
        %v1295 = vadd.f32 %v1212, %v1272
        %v1296 = vadd.f32 %v1213, %v1292
        %s1297 = scalar_lea.vmem %s1, 56
        %v1298 = vld [vmem:[%s1297] sm:$0xff]
        %1299 = vrot.lane.b32.xlu0 %v597, 91
        %v1300 = vpop.permute.xlu0 %1299
        %1301 = vrot.lane.b32.xlu0 %v611, 91
        %v1302 = vpop.permute.xlu0 %1301
        %1303 = vrot.lane.b32.xlu0 %v619, 91
        %v1304 = vpop.permute.xlu0 %1303
        %vm1305 = vcmask 744448
        %v1306 = vsel %vm1305, %v1300, %v1302
        %v1307 = vsel %vm1305, %v1302, %v1304
        %v1309 = vsel %vm744, %v1298, 0
        %v1311 = vsel %vm748, %v1306, 0
        %v1313 = vsel %vm748, %v1307, 0
        %v1315 = vsel %vm748, %v1304, 0
        %1317 = vmatpush.msra.mxu0 0.0
        %1318 = vmatpush.msra.mxu0 0.0
        %1319 = vmatpush.msra.mxu0 0.0
        %1320 = vmatpush.msra.mxu0 0.0
        %1321 = vmatpush.msra.mxu0 0.0
        %1322 = vmatpush.msra.mxu0 0.0
        %1323 = vmatpush.msra.mxu0 0.0
        %1324 = vmatpush.msra.mxu0 0.0
        %1325 = vmatpush.msra.mxu0 0.0
        %1326 = vmatpush.msra.mxu0 0.0
        %1327 = vmatpush.msra.mxu0 0.0
        %1328 = vmatpush.msra.mxu0 0.0
        %1329 = vmatpush.msra.mxu0 0.0
        %1330 = vmatpush.msra.mxu0 0.0
        %1331 = vmatpush.msra.mxu0 0.0
        %1332 = vmatpush.msra.mxu0 %v1311
        %1333 = vmatmul.f32.gmra.mxu0 %v1309
        %v1334 = vpop.f32.mrf.mxu0
        %v1335 = vadd.f32 0.0, %v1334
        %1336 = vdwg.mxu0
        %1337 = vmatpush.msra.mxu0 0.0
        %1338 = vmatpush.msra.mxu0 0.0
        %1339 = vmatpush.msra.mxu0 0.0
        %1340 = vmatpush.msra.mxu0 0.0
        %1341 = vmatpush.msra.mxu0 0.0
        %1342 = vmatpush.msra.mxu0 0.0
        %1343 = vmatpush.msra.mxu0 0.0
        %1344 = vmatpush.msra.mxu0 0.0
        %1345 = vmatpush.msra.mxu0 0.0
        %1346 = vmatpush.msra.mxu0 0.0
        %1347 = vmatpush.msra.mxu0 0.0
        %1348 = vmatpush.msra.mxu0 0.0
        %1349 = vmatpush.msra.mxu0 0.0
        %1350 = vmatpush.msra.mxu0 0.0
        %1351 = vmatpush.msra.mxu0 0.0
        %1352 = vmatpush.msra.mxu0 %v1313
        %1353 = vmatmul.f32.gmra.mxu0 %v1309
        %v1354 = vpop.f32.mrf.mxu0
        %v1355 = vadd.f32 0.0, %v1354
        %1356 = vdwg.mxu0
        %1357 = vmatpush.msra.mxu0 0.0
        %1358 = vmatpush.msra.mxu0 0.0
        %1359 = vmatpush.msra.mxu0 0.0
        %1360 = vmatpush.msra.mxu0 0.0
        %1361 = vmatpush.msra.mxu0 0.0
        %1362 = vmatpush.msra.mxu0 0.0
        %1363 = vmatpush.msra.mxu0 0.0
        %1364 = vmatpush.msra.mxu0 0.0
        %1365 = vmatpush.msra.mxu0 0.0
        %1366 = vmatpush.msra.mxu0 0.0
        %1367 = vmatpush.msra.mxu0 0.0
        %1368 = vmatpush.msra.mxu0 0.0
        %1369 = vmatpush.msra.mxu0 0.0
        %1370 = vmatpush.msra.mxu0 0.0
        %1371 = vmatpush.msra.mxu0 0.0
        %1372 = vmatpush.msra.mxu0 %v1315
        %1373 = vmatmul.f32.gmra.mxu0 %v1309
        %v1374 = vpop.f32.mrf.mxu0
        %v1375 = vadd.f32 0.0, %v1374
        %1376 = vdwg.mxu0
        %v1377 = vadd.f32 %v1294, %v1335
        %v1378 = vadd.f32 %v1295, %v1355
        %v1379 = vadd.f32 %v1296, %v1375
        %s1380 = scalar_lea.vmem %s1, 64
        %v1381 = vld [vmem:[%s1380] sm:$0xff]
        %1382 = vrot.lane.b32.xlu0 %v597, 90
        %v1383 = vpop.permute.xlu0 %1382
        %1384 = vrot.lane.b32.xlu0 %v611, 90
        %v1385 = vpop.permute.xlu0 %1384
        %1386 = vrot.lane.b32.xlu0 %v619, 90
        %v1387 = vpop.permute.xlu0 %1386
        %v1388 = vsel %vm592, %v1383, %v1385
        %v1389 = vsel %vm592, %v1385, %v1387
        %v1391 = vsel %vm744, %v1381, 0
        %v1393 = vsel %vm748, %v1388, 0
        %v1395 = vsel %vm748, %v1389, 0
        %v1397 = vsel %vm748, %v1387, 0
        %1399 = vmatpush.msra.mxu0 0.0
        %1400 = vmatpush.msra.mxu0 0.0
        %1401 = vmatpush.msra.mxu0 0.0
        %1402 = vmatpush.msra.mxu0 0.0
        %1403 = vmatpush.msra.mxu0 0.0
        %1404 = vmatpush.msra.mxu0 0.0
        %1405 = vmatpush.msra.mxu0 0.0
        %1406 = vmatpush.msra.mxu0 0.0
        %1407 = vmatpush.msra.mxu0 0.0
        %1408 = vmatpush.msra.mxu0 0.0
        %1409 = vmatpush.msra.mxu0 0.0
        %1410 = vmatpush.msra.mxu0 0.0
        %1411 = vmatpush.msra.mxu0 0.0
        %1412 = vmatpush.msra.mxu0 0.0
        %1413 = vmatpush.msra.mxu0 0.0
        %1414 = vmatpush.msra.mxu0 %v1393
        %1415 = vmatmul.f32.gmra.mxu0 %v1391
        %v1416 = vpop.f32.mrf.mxu0
        %v1417 = vadd.f32 0.0, %v1416
        %1418 = vdwg.mxu0
        %1419 = vmatpush.msra.mxu0 0.0
        %1420 = vmatpush.msra.mxu0 0.0
        %1421 = vmatpush.msra.mxu0 0.0
        %1422 = vmatpush.msra.mxu0 0.0
        %1423 = vmatpush.msra.mxu0 0.0
        %1424 = vmatpush.msra.mxu0 0.0
        %1425 = vmatpush.msra.mxu0 0.0
        %1426 = vmatpush.msra.mxu0 0.0
        %1427 = vmatpush.msra.mxu0 0.0
        %1428 = vmatpush.msra.mxu0 0.0
        %1429 = vmatpush.msra.mxu0 0.0
        %1430 = vmatpush.msra.mxu0 0.0
        %1431 = vmatpush.msra.mxu0 0.0
        %1432 = vmatpush.msra.mxu0 0.0
        %1433 = vmatpush.msra.mxu0 0.0
        %1434 = vmatpush.msra.mxu0 %v1395
        %1435 = vmatmul.f32.gmra.mxu0 %v1391
        %v1436 = vpop.f32.mrf.mxu0
        %v1437 = vadd.f32 0.0, %v1436
        %1438 = vdwg.mxu0
        %1439 = vmatpush.msra.mxu0 0.0
        %1440 = vmatpush.msra.mxu0 0.0
        %1441 = vmatpush.msra.mxu0 0.0
        %1442 = vmatpush.msra.mxu0 0.0
        %1443 = vmatpush.msra.mxu0 0.0
        %1444 = vmatpush.msra.mxu0 0.0
        %1445 = vmatpush.msra.mxu0 0.0
        %1446 = vmatpush.msra.mxu0 0.0
        %1447 = vmatpush.msra.mxu0 0.0
        %1448 = vmatpush.msra.mxu0 0.0
        %1449 = vmatpush.msra.mxu0 0.0
        %1450 = vmatpush.msra.mxu0 0.0
        %1451 = vmatpush.msra.mxu0 0.0
        %1452 = vmatpush.msra.mxu0 0.0
        %1453 = vmatpush.msra.mxu0 0.0
        %1454 = vmatpush.msra.mxu0 %v1397
        %1455 = vmatmul.f32.gmra.mxu0 %v1391
        %v1456 = vpop.f32.mrf.mxu0
        %v1457 = vadd.f32 0.0, %v1456
        %1458 = vdwg.mxu0
        %v1459 = vadd.f32 %v1377, %v1417
        %v1460 = vadd.f32 %v1378, %v1437
        %v1461 = vadd.f32 %v1379, %v1457
        %v1462 = vld [vmem:[%s2] sm:$0xff]
        %1464 = vset.pattern.permute.xlu0 0
        %1465 = vperm.xlu0 %1464, %v1462
        %v1466 = vpop.permute.xlu0 %1465
        %v1468 = vmul.f32 %v1459, %v1466
        %v1469 = vmul.f32 %v1460, %v1466
        %v1470 = vmul.f32 %v1461, %v1466
        %v1471 = vld [vmem:[%s3] sm:$0xff]
        %1473 = vset.pattern.permute.xlu0 0
        %1474 = vperm.xlu0 %1473, %v1471
        %v1475 = vpop.permute.xlu0 %1474
        %v1477 = vadd.f32 %v1468, %v1475
        %v1478 = vadd.f32 %v1469, %v1475
        %v1479 = vadd.f32 %v1470, %v1475
        %v1480 = vmax.f32 %v1477, 0.0
        %v1481 = vmax.f32 %v1478, 0.0
        %v1482 = vmax.f32 %v1479, 0.0
        %v1483 = vsel %vm726, 1, 0
        %v1484 = vsel %vm727, 1, 0
        %v1485 = vsel %vm728, 1, 0
        %vm1486 = vcmp.eq.s32.totalorder %v1483, 1
        %vm1487 = vcmp.eq.s32.totalorder %v1484, 1
        %vm1488 = vcmp.eq.s32.totalorder %v1485, 1
        %v1489 = vsel %vm1486, %v1480, 0.0
        %v1490 = vsel %vm1487, %v1481, 0.0
        %v1491 = vsel %vm1488, %v1482, 0.0
        %1492 = vst [vmem:[#allocation3] sm:$0xff] 0.0
        %1493 = vst [vmem:[#allocation3 + $0x8] sm:$0xff] 0.0
        %vm1494 = vcmask 703488
        %1495 = vst.msk [vmem:[#allocation3 + $0x10] sm:$0xff] %vm1494, 0.0
        %1499 = vrot.lane.b32.xlu0 %v1489, 19
        %v1500 = vpop.permute.xlu0 %1499
        %1501 = vrot.lane.b32.xlu0 %v1490, 19
        %v1502 = vpop.permute.xlu0 %1501
        %1503 = vrot.lane.b32.xlu0 %v1491, 19
        %v1504 = vpop.permute.xlu0 %1503
        %vm1505 = vcmask 154624
        %v1506 = vsel %vm1505, %v1500, %v1502
        %v1507 = vsel %vm1505, %v1502, %v1504
        %vm1511 = vcmask 1047704
        %1512 = vst.msk [vmem:[#allocation3] sm:$0xff] %vm1511, %v1500
        %1513 = vst [vmem:[#allocation3 + $0x8] sm:$0xff] %v1506
        %vm1514 = vcmask 416768
        %1515 = vst.msk [vmem:[#allocation3 + $0x10] sm:$0xff] %vm1514, %v1507
        %v1516 = vld [vmem:[#allocation3] sm:$0xff]
        %v1517 = vld [vmem:[#allocation3 + $0x8] sm:$0xff]
        %v1518 = vld [vmem:[#allocation3 + $0x10] sm:$0xff]
        %v1519 = vld [vmem:[%s4] sm:$0xff]
        %s1520 = scalar_lea.vmem %s4, 8
        %v1521 = vld [vmem:[%s1520] sm:$0xff]
        %1525 = vrot.lane.b32.xlu0 %v1516, 127
        %v1526 = vpop.permute.xlu0 %1525
        %1527 = vrot.lane.b32.xlu0 %v1517, 127
        %v1528 = vpop.permute.xlu0 %1527
        %1529 = vrot.lane.b32.xlu0 %v1518, 127
        %v1530 = vpop.permute.xlu0 %1529
        %v1531 = vsel %vm741, %v1526, %v1528
        %v1532 = vsel %vm741, %v1528, %v1530
        %vm1536 = vcmask 64512
        %v1538 = vsel %vm1536, %v1521, 0
        %1540 = vmatpush.msra.mxu0 0.0
        %1541 = vmatpush.msra.mxu0 0.0
        %1542 = vmatpush.msra.mxu0 0.0
        %1543 = vmatpush.msra.mxu0 0.0
        %1544 = vmatpush.msra.mxu0 0.0
        %1545 = vmatpush.msra.mxu0 0.0
        %1546 = vmatpush.msra.mxu0 0.0
        %1547 = vmatpush.msra.mxu0 0.0
        %1548 = vmatpush.msra.mxu0 0.0
        %1549 = vmatpush.msra.mxu0 0.0
        %1550 = vmatpush.msra.mxu0 0.0
        %1551 = vmatpush.msra.mxu0 0.0
        %1552 = vmatpush.msra.mxu0 0.0
        %1553 = vmatpush.msra.mxu0 0.0
        %1554 = vmatpush.msra.mxu0 0.0
        %1555 = vmatpush.msra.mxu0 %v1531
        %1556 = vmatmul.f32.gmra.mxu0 %v1538
        %v1557 = vpop.f32.mrf.mxu0
        %v1558 = vadd.f32 0.0, %v1557
        %1559 = vdwg.mxu0
        %1560 = vmatpush.msra.mxu0 0.0
        %1561 = vmatpush.msra.mxu0 0.0
        %1562 = vmatpush.msra.mxu0 0.0
        %1563 = vmatpush.msra.mxu0 0.0
        %1564 = vmatpush.msra.mxu0 0.0
        %1565 = vmatpush.msra.mxu0 0.0
        %1566 = vmatpush.msra.mxu0 0.0
        %1567 = vmatpush.msra.mxu0 0.0
        %1568 = vmatpush.msra.mxu0 0.0
        %1569 = vmatpush.msra.mxu0 0.0
        %1570 = vmatpush.msra.mxu0 0.0
        %1571 = vmatpush.msra.mxu0 0.0
        %1572 = vmatpush.msra.mxu0 0.0
        %1573 = vmatpush.msra.mxu0 0.0
        %1574 = vmatpush.msra.mxu0 0.0
        %1575 = vmatpush.msra.mxu0 %v1532
        %1576 = vmatmul.f32.gmra.mxu0 %v1538
        %v1577 = vpop.f32.mrf.mxu0
        %v1578 = vadd.f32 0.0, %v1577
        %1579 = vdwg.mxu0
        %1580 = vmatpush.msra.mxu0 0.0
        %1581 = vmatpush.msra.mxu0 0.0
        %1582 = vmatpush.msra.mxu0 0.0
        %1583 = vmatpush.msra.mxu0 0.0
        %1584 = vmatpush.msra.mxu0 0.0
        %1585 = vmatpush.msra.mxu0 0.0
        %1586 = vmatpush.msra.mxu0 0.0
        %1587 = vmatpush.msra.mxu0 0.0
        %1588 = vmatpush.msra.mxu0 0.0
        %1589 = vmatpush.msra.mxu0 0.0
        %1590 = vmatpush.msra.mxu0 0.0
        %1591 = vmatpush.msra.mxu0 0.0
        %1592 = vmatpush.msra.mxu0 0.0
        %1593 = vmatpush.msra.mxu0 0.0
        %1594 = vmatpush.msra.mxu0 0.0
        %1595 = vmatpush.msra.mxu0 %v1530
        %1596 = vmatmul.f32.gmra.mxu0 %v1538
        %v1597 = vpop.f32.mrf.mxu0
        %v1598 = vadd.f32 0.0, %v1597
        %1599 = vdwg.mxu0
        %v1601 = vsel %vm1536, %v1519, 0
        %1603 = vmatpush.msra.mxu0 0.0
        %1604 = vmatpush.msra.mxu0 0.0
        %1605 = vmatpush.msra.mxu0 0.0
        %1606 = vmatpush.msra.mxu0 0.0
        %1607 = vmatpush.msra.mxu0 0.0
        %1608 = vmatpush.msra.mxu0 0.0
        %1609 = vmatpush.msra.mxu0 0.0
        %1610 = vmatpush.msra.mxu0 0.0
        %1611 = vmatpush.msra.mxu0 0.0
        %1612 = vmatpush.msra.mxu0 0.0
        %1613 = vmatpush.msra.mxu0 0.0
        %1614 = vmatpush.msra.mxu0 0.0
        %1615 = vmatpush.msra.mxu0 0.0
        %1616 = vmatpush.msra.mxu0 0.0
        %1617 = vmatpush.msra.mxu0 0.0
        %1618 = vmatpush.msra.mxu0 %v1516
        %1619 = vmatmul.f32.gmra.mxu0 %v1601
        %v1620 = vpop.f32.mrf.mxu0
        %v1621 = vadd.f32 %v1558, %v1620
        %1622 = vdwg.mxu0
        %1623 = vmatpush.msra.mxu0 0.0
        %1624 = vmatpush.msra.mxu0 0.0
        %1625 = vmatpush.msra.mxu0 0.0
        %1626 = vmatpush.msra.mxu0 0.0
        %1627 = vmatpush.msra.mxu0 0.0
        %1628 = vmatpush.msra.mxu0 0.0
        %1629 = vmatpush.msra.mxu0 0.0
        %1630 = vmatpush.msra.mxu0 0.0
        %1631 = vmatpush.msra.mxu0 0.0
        %1632 = vmatpush.msra.mxu0 0.0
        %1633 = vmatpush.msra.mxu0 0.0
        %1634 = vmatpush.msra.mxu0 0.0
        %1635 = vmatpush.msra.mxu0 0.0
        %1636 = vmatpush.msra.mxu0 0.0
        %1637 = vmatpush.msra.mxu0 0.0
        %1638 = vmatpush.msra.mxu0 %v1517
        %1639 = vmatmul.f32.gmra.mxu0 %v1601
        %v1640 = vpop.f32.mrf.mxu0
        %v1641 = vadd.f32 %v1578, %v1640
        %1642 = vdwg.mxu0
        %1643 = vmatpush.msra.mxu0 0.0
        %1644 = vmatpush.msra.mxu0 0.0
        %1645 = vmatpush.msra.mxu0 0.0
        %1646 = vmatpush.msra.mxu0 0.0
        %1647 = vmatpush.msra.mxu0 0.0
        %1648 = vmatpush.msra.mxu0 0.0
        %1649 = vmatpush.msra.mxu0 0.0
        %1650 = vmatpush.msra.mxu0 0.0
        %1651 = vmatpush.msra.mxu0 0.0
        %1652 = vmatpush.msra.mxu0 0.0
        %1653 = vmatpush.msra.mxu0 0.0
        %1654 = vmatpush.msra.mxu0 0.0
        %1655 = vmatpush.msra.mxu0 0.0
        %1656 = vmatpush.msra.mxu0 0.0
        %1657 = vmatpush.msra.mxu0 0.0
        %1658 = vmatpush.msra.mxu0 %v1518
        %1659 = vmatmul.f32.gmra.mxu0 %v1601
        %v1660 = vpop.f32.mrf.mxu0
        %v1661 = vadd.f32 %v1598, %v1660
        %1662 = vdwg.mxu0
        %s1663 = scalar_lea.vmem %s4, 16
        %v1664 = vld [vmem:[%s1663] sm:$0xff]
        %1665 = vrot.lane.b32.xlu0 %v1516, 126
        %v1666 = vpop.permute.xlu0 %1665
        %1667 = vrot.lane.b32.xlu0 %v1517, 126
        %v1668 = vpop.permute.xlu0 %1667
        %1669 = vrot.lane.b32.xlu0 %v1518, 126
        %v1670 = vpop.permute.xlu0 %1669
        %v1671 = vsel %vm596, %v1666, %v1668
        %v1672 = vsel %vm596, %v1668, %v1670
        %v1677 = vsel %vm1536, %v1664, 0
        %1679 = vmatpush.msra.mxu0 0.0
        %1680 = vmatpush.msra.mxu0 0.0
        %1681 = vmatpush.msra.mxu0 0.0
        %1682 = vmatpush.msra.mxu0 0.0
        %1683 = vmatpush.msra.mxu0 0.0
        %1684 = vmatpush.msra.mxu0 0.0
        %1685 = vmatpush.msra.mxu0 0.0
        %1686 = vmatpush.msra.mxu0 0.0
        %1687 = vmatpush.msra.mxu0 0.0
        %1688 = vmatpush.msra.mxu0 0.0
        %1689 = vmatpush.msra.mxu0 0.0
        %1690 = vmatpush.msra.mxu0 0.0
        %1691 = vmatpush.msra.mxu0 0.0
        %1692 = vmatpush.msra.mxu0 0.0
        %1693 = vmatpush.msra.mxu0 0.0
        %1694 = vmatpush.msra.mxu0 %v1671
        %1695 = vmatmul.f32.gmra.mxu0 %v1677
        %v1696 = vpop.f32.mrf.mxu0
        %v1697 = vadd.f32 0.0, %v1696
        %1698 = vdwg.mxu0
        %1699 = vmatpush.msra.mxu0 0.0
        %1700 = vmatpush.msra.mxu0 0.0
        %1701 = vmatpush.msra.mxu0 0.0
        %1702 = vmatpush.msra.mxu0 0.0
        %1703 = vmatpush.msra.mxu0 0.0
        %1704 = vmatpush.msra.mxu0 0.0
        %1705 = vmatpush.msra.mxu0 0.0
        %1706 = vmatpush.msra.mxu0 0.0
        %1707 = vmatpush.msra.mxu0 0.0
        %1708 = vmatpush.msra.mxu0 0.0
        %1709 = vmatpush.msra.mxu0 0.0
        %1710 = vmatpush.msra.mxu0 0.0
        %1711 = vmatpush.msra.mxu0 0.0
        %1712 = vmatpush.msra.mxu0 0.0
        %1713 = vmatpush.msra.mxu0 0.0
        %1714 = vmatpush.msra.mxu0 %v1672
        %1715 = vmatmul.f32.gmra.mxu0 %v1677
        %v1716 = vpop.f32.mrf.mxu0
        %v1717 = vadd.f32 0.0, %v1716
        %1718 = vdwg.mxu0
        %1719 = vmatpush.msra.mxu0 0.0
        %1720 = vmatpush.msra.mxu0 0.0
        %1721 = vmatpush.msra.mxu0 0.0
        %1722 = vmatpush.msra.mxu0 0.0
        %1723 = vmatpush.msra.mxu0 0.0
        %1724 = vmatpush.msra.mxu0 0.0
        %1725 = vmatpush.msra.mxu0 0.0
        %1726 = vmatpush.msra.mxu0 0.0
        %1727 = vmatpush.msra.mxu0 0.0
        %1728 = vmatpush.msra.mxu0 0.0
        %1729 = vmatpush.msra.mxu0 0.0
        %1730 = vmatpush.msra.mxu0 0.0
        %1731 = vmatpush.msra.mxu0 0.0
        %1732 = vmatpush.msra.mxu0 0.0
        %1733 = vmatpush.msra.mxu0 0.0
        %1734 = vmatpush.msra.mxu0 %v1670
        %1735 = vmatmul.f32.gmra.mxu0 %v1677
        %v1736 = vpop.f32.mrf.mxu0
        %v1737 = vadd.f32 0.0, %v1736
        %1738 = vdwg.mxu0
        %v1739 = vadd.f32 %v1621, %v1697
        %v1740 = vadd.f32 %v1641, %v1717
        %v1741 = vadd.f32 %v1661, %v1737
        %s1742 = scalar_lea.vmem %s4, 24
        %v1743 = vld [vmem:[%s1742] sm:$0xff]
        %1744 = vrot.lane.b32.xlu0 %v1516, 110
        %v1745 = vpop.permute.xlu0 %1744
        %1746 = vrot.lane.b32.xlu0 %v1517, 110
        %v1747 = vpop.permute.xlu0 %1746
        %1748 = vrot.lane.b32.xlu0 %v1518, 110
        %v1749 = vpop.permute.xlu0 %1748
        %v1750 = vsel %vm974, %v1745, %v1747
        %v1751 = vsel %vm974, %v1747, %v1749
        %v1756 = vsel %vm1536, %v1743, 0
        %1758 = vmatpush.msra.mxu0 0.0
        %1759 = vmatpush.msra.mxu0 0.0
        %1760 = vmatpush.msra.mxu0 0.0
        %1761 = vmatpush.msra.mxu0 0.0
        %1762 = vmatpush.msra.mxu0 0.0
        %1763 = vmatpush.msra.mxu0 0.0
        %1764 = vmatpush.msra.mxu0 0.0
        %1765 = vmatpush.msra.mxu0 0.0
        %1766 = vmatpush.msra.mxu0 0.0
        %1767 = vmatpush.msra.mxu0 0.0
        %1768 = vmatpush.msra.mxu0 0.0
        %1769 = vmatpush.msra.mxu0 0.0
        %1770 = vmatpush.msra.mxu0 0.0
        %1771 = vmatpush.msra.mxu0 0.0
        %1772 = vmatpush.msra.mxu0 0.0
        %1773 = vmatpush.msra.mxu0 %v1750
        %1774 = vmatmul.f32.gmra.mxu0 %v1756
        %v1775 = vpop.f32.mrf.mxu0
        %v1776 = vadd.f32 0.0, %v1775
        %1777 = vdwg.mxu0
        %1778 = vmatpush.msra.mxu0 0.0
        %1779 = vmatpush.msra.mxu0 0.0
        %1780 = vmatpush.msra.mxu0 0.0
        %1781 = vmatpush.msra.mxu0 0.0
        %1782 = vmatpush.msra.mxu0 0.0
        %1783 = vmatpush.msra.mxu0 0.0
        %1784 = vmatpush.msra.mxu0 0.0
        %1785 = vmatpush.msra.mxu0 0.0
        %1786 = vmatpush.msra.mxu0 0.0
        %1787 = vmatpush.msra.mxu0 0.0
        %1788 = vmatpush.msra.mxu0 0.0
        %1789 = vmatpush.msra.mxu0 0.0
        %1790 = vmatpush.msra.mxu0 0.0
        %1791 = vmatpush.msra.mxu0 0.0
        %1792 = vmatpush.msra.mxu0 0.0
        %1793 = vmatpush.msra.mxu0 %v1751
        %1794 = vmatmul.f32.gmra.mxu0 %v1756
        %v1795 = vpop.f32.mrf.mxu0
        %v1796 = vadd.f32 0.0, %v1795
        %1797 = vdwg.mxu0
        %1798 = vmatpush.msra.mxu0 0.0
        %1799 = vmatpush.msra.mxu0 0.0
        %1800 = vmatpush.msra.mxu0 0.0
        %1801 = vmatpush.msra.mxu0 0.0
        %1802 = vmatpush.msra.mxu0 0.0
        %1803 = vmatpush.msra.mxu0 0.0
        %1804 = vmatpush.msra.mxu0 0.0
        %1805 = vmatpush.msra.mxu0 0.0
        %1806 = vmatpush.msra.mxu0 0.0
        %1807 = vmatpush.msra.mxu0 0.0
        %1808 = vmatpush.msra.mxu0 0.0
        %1809 = vmatpush.msra.mxu0 0.0
        %1810 = vmatpush.msra.mxu0 0.0
        %1811 = vmatpush.msra.mxu0 0.0
        %1812 = vmatpush.msra.mxu0 0.0
        %1813 = vmatpush.msra.mxu0 %v1749
        %1814 = vmatmul.f32.gmra.mxu0 %v1756
        %v1815 = vpop.f32.mrf.mxu0
        %v1816 = vadd.f32 0.0, %v1815
        %1817 = vdwg.mxu0
        %v1818 = vadd.f32 %v1739, %v1776
        %v1819 = vadd.f32 %v1740, %v1796
        %v1820 = vadd.f32 %v1741, %v1816
        %s1821 = scalar_lea.vmem %s4, 32
        %v1822 = vld [vmem:[%s1821] sm:$0xff]
        %1823 = vrot.lane.b32.xlu0 %v1516, 109
        %v1824 = vpop.permute.xlu0 %1823
        %1825 = vrot.lane.b32.xlu0 %v1517, 109
        %v1826 = vpop.permute.xlu0 %1825
        %1827 = vrot.lane.b32.xlu0 %v1518, 109
        %v1828 = vpop.permute.xlu0 %1827
        %v1829 = vsel %vm1057, %v1824, %v1826
        %v1830 = vsel %vm1057, %v1826, %v1828
        %v1835 = vsel %vm1536, %v1822, 0
        %1837 = vmatpush.msra.mxu0 0.0
        %1838 = vmatpush.msra.mxu0 0.0
        %1839 = vmatpush.msra.mxu0 0.0
        %1840 = vmatpush.msra.mxu0 0.0
        %1841 = vmatpush.msra.mxu0 0.0
        %1842 = vmatpush.msra.mxu0 0.0
        %1843 = vmatpush.msra.mxu0 0.0
        %1844 = vmatpush.msra.mxu0 0.0
        %1845 = vmatpush.msra.mxu0 0.0
        %1846 = vmatpush.msra.mxu0 0.0
        %1847 = vmatpush.msra.mxu0 0.0
        %1848 = vmatpush.msra.mxu0 0.0
        %1849 = vmatpush.msra.mxu0 0.0
        %1850 = vmatpush.msra.mxu0 0.0
        %1851 = vmatpush.msra.mxu0 0.0
        %1852 = vmatpush.msra.mxu0 %v1829
        %1853 = vmatmul.f32.gmra.mxu0 %v1835
        %v1854 = vpop.f32.mrf.mxu0
        %v1855 = vadd.f32 0.0, %v1854
        %1856 = vdwg.mxu0
        %1857 = vmatpush.msra.mxu0 0.0
        %1858 = vmatpush.msra.mxu0 0.0
        %1859 = vmatpush.msra.mxu0 0.0
        %1860 = vmatpush.msra.mxu0 0.0
        %1861 = vmatpush.msra.mxu0 0.0
        %1862 = vmatpush.msra.mxu0 0.0
        %1863 = vmatpush.msra.mxu0 0.0
        %1864 = vmatpush.msra.mxu0 0.0
        %1865 = vmatpush.msra.mxu0 0.0
        %1866 = vmatpush.msra.mxu0 0.0
        %1867 = vmatpush.msra.mxu0 0.0
        %1868 = vmatpush.msra.mxu0 0.0
        %1869 = vmatpush.msra.mxu0 0.0
        %1870 = vmatpush.msra.mxu0 0.0
        %1871 = vmatpush.msra.mxu0 0.0
        %1872 = vmatpush.msra.mxu0 %v1830
        %1873 = vmatmul.f32.gmra.mxu0 %v1835
        %v1874 = vpop.f32.mrf.mxu0
        %v1875 = vadd.f32 0.0, %v1874
        %1876 = vdwg.mxu0
        %1877 = vmatpush.msra.mxu0 0.0
        %1878 = vmatpush.msra.mxu0 0.0
        %1879 = vmatpush.msra.mxu0 0.0
        %1880 = vmatpush.msra.mxu0 0.0
        %1881 = vmatpush.msra.mxu0 0.0
        %1882 = vmatpush.msra.mxu0 0.0
        %1883 = vmatpush.msra.mxu0 0.0
        %1884 = vmatpush.msra.mxu0 0.0
        %1885 = vmatpush.msra.mxu0 0.0
        %1886 = vmatpush.msra.mxu0 0.0
        %1887 = vmatpush.msra.mxu0 0.0
        %1888 = vmatpush.msra.mxu0 0.0
        %1889 = vmatpush.msra.mxu0 0.0
        %1890 = vmatpush.msra.mxu0 0.0
        %1891 = vmatpush.msra.mxu0 0.0
        %1892 = vmatpush.msra.mxu0 %v1828
        %1893 = vmatmul.f32.gmra.mxu0 %v1835
        %v1894 = vpop.f32.mrf.mxu0
        %v1895 = vadd.f32 0.0, %v1894
        %1896 = vdwg.mxu0
        %v1897 = vadd.f32 %v1818, %v1855
        %v1898 = vadd.f32 %v1819, %v1875
        %v1899 = vadd.f32 %v1820, %v1895
        %s1900 = scalar_lea.vmem %s4, 40
        %v1901 = vld [vmem:[%s1900] sm:$0xff]
        %1902 = vrot.lane.b32.xlu0 %v1516, 108
        %v1903 = vpop.permute.xlu0 %1902
        %1904 = vrot.lane.b32.xlu0 %v1517, 108
        %v1905 = vpop.permute.xlu0 %1904
        %1906 = vrot.lane.b32.xlu0 %v1518, 108
        %v1907 = vpop.permute.xlu0 %1906
        %v1908 = vsel %vm594, %v1903, %v1905
        %v1909 = vsel %vm594, %v1905, %v1907
        %v1914 = vsel %vm1536, %v1901, 0
        %1916 = vmatpush.msra.mxu0 0.0
        %1917 = vmatpush.msra.mxu0 0.0
        %1918 = vmatpush.msra.mxu0 0.0
        %1919 = vmatpush.msra.mxu0 0.0
        %1920 = vmatpush.msra.mxu0 0.0
        %1921 = vmatpush.msra.mxu0 0.0
        %1922 = vmatpush.msra.mxu0 0.0
        %1923 = vmatpush.msra.mxu0 0.0
        %1924 = vmatpush.msra.mxu0 0.0
        %1925 = vmatpush.msra.mxu0 0.0
        %1926 = vmatpush.msra.mxu0 0.0
        %1927 = vmatpush.msra.mxu0 0.0
        %1928 = vmatpush.msra.mxu0 0.0
        %1929 = vmatpush.msra.mxu0 0.0
        %1930 = vmatpush.msra.mxu0 0.0
        %1931 = vmatpush.msra.mxu0 %v1908
        %1932 = vmatmul.f32.gmra.mxu0 %v1914
        %v1933 = vpop.f32.mrf.mxu0
        %v1934 = vadd.f32 0.0, %v1933
        %1935 = vdwg.mxu0
        %1936 = vmatpush.msra.mxu0 0.0
        %1937 = vmatpush.msra.mxu0 0.0
        %1938 = vmatpush.msra.mxu0 0.0
        %1939 = vmatpush.msra.mxu0 0.0
        %1940 = vmatpush.msra.mxu0 0.0
        %1941 = vmatpush.msra.mxu0 0.0
        %1942 = vmatpush.msra.mxu0 0.0
        %1943 = vmatpush.msra.mxu0 0.0
        %1944 = vmatpush.msra.mxu0 0.0
        %1945 = vmatpush.msra.mxu0 0.0
        %1946 = vmatpush.msra.mxu0 0.0
        %1947 = vmatpush.msra.mxu0 0.0
        %1948 = vmatpush.msra.mxu0 0.0
        %1949 = vmatpush.msra.mxu0 0.0
        %1950 = vmatpush.msra.mxu0 0.0
        %1951 = vmatpush.msra.mxu0 %v1909
        %1952 = vmatmul.f32.gmra.mxu0 %v1914
        %v1953 = vpop.f32.mrf.mxu0
        %v1954 = vadd.f32 0.0, %v1953
        %1955 = vdwg.mxu0
        %1956 = vmatpush.msra.mxu0 0.0
        %1957 = vmatpush.msra.mxu0 0.0
        %1958 = vmatpush.msra.mxu0 0.0
        %1959 = vmatpush.msra.mxu0 0.0
        %1960 = vmatpush.msra.mxu0 0.0
        %1961 = vmatpush.msra.mxu0 0.0
        %1962 = vmatpush.msra.mxu0 0.0
        %1963 = vmatpush.msra.mxu0 0.0
        %1964 = vmatpush.msra.mxu0 0.0
        %1965 = vmatpush.msra.mxu0 0.0
        %1966 = vmatpush.msra.mxu0 0.0
        %1967 = vmatpush.msra.mxu0 0.0
        %1968 = vmatpush.msra.mxu0 0.0
        %1969 = vmatpush.msra.mxu0 0.0
        %1970 = vmatpush.msra.mxu0 0.0
        %1971 = vmatpush.msra.mxu0 %v1907
        %1972 = vmatmul.f32.gmra.mxu0 %v1914
        %v1973 = vpop.f32.mrf.mxu0
        %v1974 = vadd.f32 0.0, %v1973
        %1975 = vdwg.mxu0
        %v1976 = vadd.f32 %v1897, %v1934
        %v1977 = vadd.f32 %v1898, %v1954
        %v1978 = vadd.f32 %v1899, %v1974
        %s1979 = scalar_lea.vmem %s4, 48
        %v1980 = vld [vmem:[%s1979] sm:$0xff]
        %1981 = vrot.lane.b32.xlu0 %v1516, 92
        %v1982 = vpop.permute.xlu0 %1981
        %1983 = vrot.lane.b32.xlu0 %v1517, 92
        %v1984 = vpop.permute.xlu0 %1983
        %1985 = vrot.lane.b32.xlu0 %v1518, 92
        %v1986 = vpop.permute.xlu0 %1985
        %v1987 = vsel %vm1222, %v1982, %v1984
        %v1988 = vsel %vm1222, %v1984, %v1986
        %v1993 = vsel %vm1536, %v1980, 0
        %1995 = vmatpush.msra.mxu0 0.0
        %1996 = vmatpush.msra.mxu0 0.0
        %1997 = vmatpush.msra.mxu0 0.0
        %1998 = vmatpush.msra.mxu0 0.0
        %1999 = vmatpush.msra.mxu0 0.0
        %2000 = vmatpush.msra.mxu0 0.0
        %2001 = vmatpush.msra.mxu0 0.0
        %2002 = vmatpush.msra.mxu0 0.0
        %2003 = vmatpush.msra.mxu0 0.0
        %2004 = vmatpush.msra.mxu0 0.0
        %2005 = vmatpush.msra.mxu0 0.0
        %2006 = vmatpush.msra.mxu0 0.0
        %2007 = vmatpush.msra.mxu0 0.0
        %2008 = vmatpush.msra.mxu0 0.0
        %2009 = vmatpush.msra.mxu0 0.0
        %2010 = vmatpush.msra.mxu0 %v1987
        %2011 = vmatmul.f32.gmra.mxu0 %v1993
        %v2012 = vpop.f32.mrf.mxu0
        %v2013 = vadd.f32 0.0, %v2012
        %2014 = vdwg.mxu0
        %2015 = vmatpush.msra.mxu0 0.0
        %2016 = vmatpush.msra.mxu0 0.0
        %2017 = vmatpush.msra.mxu0 0.0
        %2018 = vmatpush.msra.mxu0 0.0
        %2019 = vmatpush.msra.mxu0 0.0
        %2020 = vmatpush.msra.mxu0 0.0
        %2021 = vmatpush.msra.mxu0 0.0
        %2022 = vmatpush.msra.mxu0 0.0
        %2023 = vmatpush.msra.mxu0 0.0
        %2024 = vmatpush.msra.mxu0 0.0
        %2025 = vmatpush.msra.mxu0 0.0
        %2026 = vmatpush.msra.mxu0 0.0
        %2027 = vmatpush.msra.mxu0 0.0
        %2028 = vmatpush.msra.mxu0 0.0
        %2029 = vmatpush.msra.mxu0 0.0
        %2030 = vmatpush.msra.mxu0 %v1988
        %2031 = vmatmul.f32.gmra.mxu0 %v1993
        %v2032 = vpop.f32.mrf.mxu0
        %v2033 = vadd.f32 0.0, %v2032
        %2034 = vdwg.mxu0
        %2035 = vmatpush.msra.mxu0 0.0
        %2036 = vmatpush.msra.mxu0 0.0
        %2037 = vmatpush.msra.mxu0 0.0
        %2038 = vmatpush.msra.mxu0 0.0
        %2039 = vmatpush.msra.mxu0 0.0
        %2040 = vmatpush.msra.mxu0 0.0
        %2041 = vmatpush.msra.mxu0 0.0
        %2042 = vmatpush.msra.mxu0 0.0
        %2043 = vmatpush.msra.mxu0 0.0
        %2044 = vmatpush.msra.mxu0 0.0
        %2045 = vmatpush.msra.mxu0 0.0
        %2046 = vmatpush.msra.mxu0 0.0
        %2047 = vmatpush.msra.mxu0 0.0
        %2048 = vmatpush.msra.mxu0 0.0
        %2049 = vmatpush.msra.mxu0 0.0
        %2050 = vmatpush.msra.mxu0 %v1986
        %2051 = vmatmul.f32.gmra.mxu0 %v1993
        %v2052 = vpop.f32.mrf.mxu0
        %v2053 = vadd.f32 0.0, %v2052
        %2054 = vdwg.mxu0
        %v2055 = vadd.f32 %v1976, %v2013
        %v2056 = vadd.f32 %v1977, %v2033
        %v2057 = vadd.f32 %v1978, %v2053
        %s2058 = scalar_lea.vmem %s4, 56
        %v2059 = vld [vmem:[%s2058] sm:$0xff]
        %2060 = vrot.lane.b32.xlu0 %v1516, 91
        %v2061 = vpop.permute.xlu0 %2060
        %2062 = vrot.lane.b32.xlu0 %v1517, 91
        %v2063 = vpop.permute.xlu0 %2062
        %2064 = vrot.lane.b32.xlu0 %v1518, 91
        %v2065 = vpop.permute.xlu0 %2064
        %v2066 = vsel %vm1305, %v2061, %v2063
        %v2067 = vsel %vm1305, %v2063, %v2065
        %v2072 = vsel %vm1536, %v2059, 0
        %2074 = vmatpush.msra.mxu0 0.0
        %2075 = vmatpush.msra.mxu0 0.0
        %2076 = vmatpush.msra.mxu0 0.0
        %2077 = vmatpush.msra.mxu0 0.0
        %2078 = vmatpush.msra.mxu0 0.0
        %2079 = vmatpush.msra.mxu0 0.0
        %2080 = vmatpush.msra.mxu0 0.0
        %2081 = vmatpush.msra.mxu0 0.0
        %2082 = vmatpush.msra.mxu0 0.0
        %2083 = vmatpush.msra.mxu0 0.0
        %2084 = vmatpush.msra.mxu0 0.0
        %2085 = vmatpush.msra.mxu0 0.0
        %2086 = vmatpush.msra.mxu0 0.0
        %2087 = vmatpush.msra.mxu0 0.0
        %2088 = vmatpush.msra.mxu0 0.0
        %2089 = vmatpush.msra.mxu0 %v2066
        %2090 = vmatmul.f32.gmra.mxu0 %v2072
        %v2091 = vpop.f32.mrf.mxu0
        %v2092 = vadd.f32 0.0, %v2091
        %2093 = vdwg.mxu0
        %2094 = vmatpush.msra.mxu0 0.0
        %2095 = vmatpush.msra.mxu0 0.0
        %2096 = vmatpush.msra.mxu0 0.0
        %2097 = vmatpush.msra.mxu0 0.0
        %2098 = vmatpush.msra.mxu0 0.0
        %2099 = vmatpush.msra.mxu0 0.0
        %2100 = vmatpush.msra.mxu0 0.0
        %2101 = vmatpush.msra.mxu0 0.0
        %2102 = vmatpush.msra.mxu0 0.0
        %2103 = vmatpush.msra.mxu0 0.0
        %2104 = vmatpush.msra.mxu0 0.0
        %2105 = vmatpush.msra.mxu0 0.0
        %2106 = vmatpush.msra.mxu0 0.0
        %2107 = vmatpush.msra.mxu0 0.0
        %2108 = vmatpush.msra.mxu0 0.0
        %2109 = vmatpush.msra.mxu0 %v2067
        %2110 = vmatmul.f32.gmra.mxu0 %v2072
        %v2111 = vpop.f32.mrf.mxu0
        %v2112 = vadd.f32 0.0, %v2111
        %2113 = vdwg.mxu0
        %2114 = vmatpush.msra.mxu0 0.0
        %2115 = vmatpush.msra.mxu0 0.0
        %2116 = vmatpush.msra.mxu0 0.0
        %2117 = vmatpush.msra.mxu0 0.0
        %2118 = vmatpush.msra.mxu0 0.0
        %2119 = vmatpush.msra.mxu0 0.0
        %2120 = vmatpush.msra.mxu0 0.0
        %2121 = vmatpush.msra.mxu0 0.0
        %2122 = vmatpush.msra.mxu0 0.0
        %2123 = vmatpush.msra.mxu0 0.0
        %2124 = vmatpush.msra.mxu0 0.0
        %2125 = vmatpush.msra.mxu0 0.0
        %2126 = vmatpush.msra.mxu0 0.0
        %2127 = vmatpush.msra.mxu0 0.0
        %2128 = vmatpush.msra.mxu0 0.0
        %2129 = vmatpush.msra.mxu0 %v2065
        %2130 = vmatmul.f32.gmra.mxu0 %v2072
        %v2131 = vpop.f32.mrf.mxu0
        %v2132 = vadd.f32 0.0, %v2131
        %2133 = vdwg.mxu0
        %v2134 = vadd.f32 %v2055, %v2092
        %v2135 = vadd.f32 %v2056, %v2112
        %v2136 = vadd.f32 %v2057, %v2132
        %s2137 = scalar_lea.vmem %s4, 64
        %v2138 = vld [vmem:[%s2137] sm:$0xff]
        %2139 = vrot.lane.b32.xlu0 %v1516, 90
        %v2140 = vpop.permute.xlu0 %2139
        %2141 = vrot.lane.b32.xlu0 %v1517, 90
        %v2142 = vpop.permute.xlu0 %2141
        %2143 = vrot.lane.b32.xlu0 %v1518, 90
        %v2144 = vpop.permute.xlu0 %2143
        %v2145 = vsel %vm592, %v2140, %v2142
        %v2146 = vsel %vm592, %v2142, %v2144
        %v2151 = vsel %vm1536, %v2138, 0
        %2153 = vmatpush.msra.mxu0 0.0
        %2154 = vmatpush.msra.mxu0 0.0
        %2155 = vmatpush.msra.mxu0 0.0
        %2156 = vmatpush.msra.mxu0 0.0
        %2157 = vmatpush.msra.mxu0 0.0
        %2158 = vmatpush.msra.mxu0 0.0
        %2159 = vmatpush.msra.mxu0 0.0
        %2160 = vmatpush.msra.mxu0 0.0
        %2161 = vmatpush.msra.mxu0 0.0
        %2162 = vmatpush.msra.mxu0 0.0
        %2163 = vmatpush.msra.mxu0 0.0
        %2164 = vmatpush.msra.mxu0 0.0
        %2165 = vmatpush.msra.mxu0 0.0
        %2166 = vmatpush.msra.mxu0 0.0
        %2167 = vmatpush.msra.mxu0 0.0
        %2168 = vmatpush.msra.mxu0 %v2145
        %2169 = vmatmul.f32.gmra.mxu0 %v2151
        %v2170 = vpop.f32.mrf.mxu0
        %v2171 = vadd.f32 0.0, %v2170
        %2172 = vdwg.mxu0
        %2173 = vmatpush.msra.mxu0 0.0
        %2174 = vmatpush.msra.mxu0 0.0
        %2175 = vmatpush.msra.mxu0 0.0
        %2176 = vmatpush.msra.mxu0 0.0
        %2177 = vmatpush.msra.mxu0 0.0
        %2178 = vmatpush.msra.mxu0 0.0
        %2179 = vmatpush.msra.mxu0 0.0
        %2180 = vmatpush.msra.mxu0 0.0
        %2181 = vmatpush.msra.mxu0 0.0
        %2182 = vmatpush.msra.mxu0 0.0
        %2183 = vmatpush.msra.mxu0 0.0
        %2184 = vmatpush.msra.mxu0 0.0
        %2185 = vmatpush.msra.mxu0 0.0
        %2186 = vmatpush.msra.mxu0 0.0
        %2187 = vmatpush.msra.mxu0 0.0
        %2188 = vmatpush.msra.mxu0 %v2146
        %2189 = vmatmul.f32.gmra.mxu0 %v2151
        %v2190 = vpop.f32.mrf.mxu0
        %v2191 = vadd.f32 0.0, %v2190
        %2192 = vdwg.mxu0
        %2193 = vmatpush.msra.mxu0 0.0
        %2194 = vmatpush.msra.mxu0 0.0
        %2195 = vmatpush.msra.mxu0 0.0
        %2196 = vmatpush.msra.mxu0 0.0
        %2197 = vmatpush.msra.mxu0 0.0
        %2198 = vmatpush.msra.mxu0 0.0
        %2199 = vmatpush.msra.mxu0 0.0
        %2200 = vmatpush.msra.mxu0 0.0
        %2201 = vmatpush.msra.mxu0 0.0
        %2202 = vmatpush.msra.mxu0 0.0
        %2203 = vmatpush.msra.mxu0 0.0
        %2204 = vmatpush.msra.mxu0 0.0
        %2205 = vmatpush.msra.mxu0 0.0
        %2206 = vmatpush.msra.mxu0 0.0
        %2207 = vmatpush.msra.mxu0 0.0
        %2208 = vmatpush.msra.mxu0 %v2144
        %2209 = vmatmul.f32.gmra.mxu0 %v2151
        %v2210 = vpop.f32.mrf.mxu0
        %v2211 = vadd.f32 0.0, %v2210
        %2212 = vdwg.mxu0
        %v2213 = vadd.f32 %v2134, %v2171
        %v2214 = vadd.f32 %v2135, %v2191
        %v2215 = vadd.f32 %v2136, %v2211
        %v2216 = vld [vmem:[%s5] sm:$0xff]
        %2218 = vset.pattern.permute.xlu0 0
        %2219 = vperm.xlu0 %2218, %v2216
        %v2220 = vpop.permute.xlu0 %2219
        %v2222 = vmul.f32 %v2213, %v2220
        %v2223 = vmul.f32 %v2214, %v2220
        %v2224 = vmul.f32 %v2215, %v2220
        %v2225 = vld [vmem:[%s6] sm:$0xff]
        %2227 = vset.pattern.permute.xlu0 0
        %2228 = vperm.xlu0 %2227, %v2225
        %v2229 = vpop.permute.xlu0 %2228
        %v2231 = vadd.f32 %v2222, %v2229
        %v2232 = vadd.f32 %v2223, %v2229
        %v2233 = vadd.f32 %v2224, %v2229
        %v2234 = vmax.f32 %v2231, 0.0
        %v2235 = vmax.f32 %v2232, 0.0
        %v2236 = vmax.f32 %v2233, 0.0
        %2238 = vrot.lane.b32.xlu0 %v2234, 110
        %v2239 = vpop.permute.xlu0 %2238
        %2241 = vrot.lane.b32.xlu0 %v2234, 92
        %v2242 = vpop.permute.xlu0 %2241
        %2244 = vrot.lane.b32.xlu0 %v2234, 74
        %v2245 = vpop.permute.xlu0 %2244
        %2247 = vrot.lane.b32.xlu0 %v2234, 56
        %v2248 = vpop.permute.xlu0 %2247
        %2250 = vrot.lane.b32.xlu0 %v2234, 38
        %v2251 = vpop.permute.xlu0 %2250
        %2253 = vrot.lane.b32.xlu0 %v2234, 20
        %v2254 = vpop.permute.xlu0 %2253
        %2257 = vrot.lane.b32.xlu0 %v2234, 2
        %v2258 = vpop.permute.xlu0 %2257
        %2259 = vrot.lane.b32.xlu0 %v2235, 2
        %v2260 = vpop.permute.xlu0 %2259
        %vm2261 = vcmask 15360
        %v2262 = vsel %vm2261, %v2258, %v2260
        %2264 = vrot.lane.b32.xlu0 %v2235, 112
        %v2265 = vpop.permute.xlu0 %2264
        %2267 = vrot.lane.b32.xlu0 %v2235, 94
        %v2268 = vpop.permute.xlu0 %2267
        %2270 = vrot.lane.b32.xlu0 %v2235, 76
        %v2271 = vpop.permute.xlu0 %2270
        %2273 = vrot.lane.b32.xlu0 %v2235, 58
        %v2274 = vpop.permute.xlu0 %2273
        %2276 = vrot.lane.b32.xlu0 %v2235, 40
        %v2277 = vpop.permute.xlu0 %2276
        %2279 = vrot.lane.b32.xlu0 %v2235, 22
        %v2280 = vpop.permute.xlu0 %2279
        %2283 = vrot.lane.b32.xlu0 %v2235, 4
        %v2284 = vpop.permute.xlu0 %2283
        %2285 = vrot.lane.b32.xlu0 %v2236, 4
        %v2286 = vpop.permute.xlu0 %2285
        %v2287 = vsel %vm744, %v2284, %v2286
        %2289 = vrot.lane.b32.xlu0 %v2236, 114
        %v2290 = vpop.permute.xlu0 %2289
        %v2292 = vrot.slane %v2242, 4
        %v2293 = vsel %vm375, %v2292, %v2234
        %v2294 = vrot.slane %v2234, 4
        %v2295 = vsel %vm375, %v2242, %v2294
        %v2297 = vunpack.c.l.s4 1983009808
        %v2298 = vunpack.c.0.s8 %v2297
        %v2299 = vperm.slane %v2293, %v2298
        %v2301 = vunpack.c.l.s4 1983009808
        %v2302 = vunpack.c.0.s8 %v2301
        %v2303 = vperm.slane %v2295, %v2302
        %v2304 = vrot.slane %v2245, 4
        %v2305 = vsel %vm375, %v2304, %v2239
        %v2306 = vrot.slane %v2239, 4
        %v2307 = vsel %vm375, %v2245, %v2306
        %v2309 = vunpack.c.l.s4 1983009808
        %v2310 = vunpack.c.0.s8 %v2309
        %v2311 = vperm.slane %v2305, %v2310
        %v2313 = vunpack.c.l.s4 1983009808
        %v2314 = vunpack.c.0.s8 %v2313
        %v2315 = vperm.slane %v2307, %v2314
        %v2316 = vrot.slane %v2254, 4
        %v2317 = vsel %vm375, %v2316, %v2248
        %v2318 = vrot.slane %v2248, 4
        %v2319 = vsel %vm375, %v2254, %v2318
        %v2321 = vunpack.c.l.s4 1983009808
        %v2322 = vunpack.c.0.s8 %v2321
        %v2323 = vperm.slane %v2317, %v2322
        %v2325 = vunpack.c.l.s4 1983009808
        %v2326 = vunpack.c.0.s8 %v2325
        %v2327 = vperm.slane %v2319, %v2326
        %v2328 = vrot.slane %v2262, 4
        %v2329 = vsel %vm375, %v2328, %v2251
        %v2330 = vrot.slane %v2251, 4
        %v2331 = vsel %vm375, %v2262, %v2330
        %v2333 = vunpack.c.l.s4 1983009808
        %v2334 = vunpack.c.0.s8 %v2333
        %v2335 = vperm.slane %v2329, %v2334
        %v2337 = vunpack.c.l.s4 1983009808
        %v2338 = vunpack.c.0.s8 %v2337
        %v2339 = vperm.slane %v2331, %v2338
        %v2340 = vrot.slane %v2311, 4
        %v2341 = vsel %vm375, %v2340, %v2299
        %v2342 = vrot.slane %v2299, 4
        %v2343 = vsel %vm375, %v2311, %v2342
        %v2345 = vunpack.c.l.s4 1934713408
        %v2346 = vunpack.c.0.s8 %v2345
        %v2347 = vperm.slane %v2341, %v2346
        %v2349 = vunpack.c.l.s4 1934713408
        %v2350 = vunpack.c.0.s8 %v2349
        %v2351 = vperm.slane %v2343, %v2350
        %v2352 = vrot.slane %v2315, 4
        %v2353 = vsel %vm375, %v2352, %v2303
        %v2354 = vrot.slane %v2303, 4
        %v2355 = vsel %vm375, %v2315, %v2354
        %v2357 = vunpack.c.l.s4 1934713408
        %v2358 = vunpack.c.0.s8 %v2357
        %v2359 = vperm.slane %v2353, %v2358
        %v2361 = vunpack.c.l.s4 1934713408
        %v2362 = vunpack.c.0.s8 %v2361
        %v2363 = vperm.slane %v2355, %v2362
        %v2364 = vrot.slane %v2335, 4
        %v2365 = vsel %vm375, %v2364, %v2323
        %v2366 = vrot.slane %v2323, 4
        %v2367 = vsel %vm375, %v2335, %v2366
        %v2369 = vunpack.c.l.s4 1934713408
        %v2370 = vunpack.c.0.s8 %v2369
        %v2371 = vperm.slane %v2365, %v2370
        %v2373 = vunpack.c.l.s4 1934713408
        %v2374 = vunpack.c.0.s8 %v2373
        %v2375 = vperm.slane %v2367, %v2374
        %v2376 = vrot.slane %v2339, 4
        %v2377 = vsel %vm375, %v2376, %v2327
        %v2378 = vrot.slane %v2327, 4
        %v2379 = vsel %vm375, %v2339, %v2378
        %v2381 = vunpack.c.l.s4 1934713408
        %v2382 = vunpack.c.0.s8 %v2381
        %v2383 = vperm.slane %v2377, %v2382
        %v2385 = vunpack.c.l.s4 1934713408
        %v2386 = vunpack.c.0.s8 %v2385
        %v2387 = vperm.slane %v2379, %v2386
        %v2388 = vrot.slane %v2371, 4
        %v2389 = vsel %vm375, %v2388, %v2347
        %v2390 = vrot.slane %v2347, 4
        %v2391 = vsel %vm375, %v2371, %v2390
        %v2392 = vrot.slane %v2375, 4
        %v2393 = vsel %vm375, %v2392, %v2351
        %v2394 = vrot.slane %v2351, 4
        %v2395 = vsel %vm375, %v2375, %v2394
        %v2396 = vrot.slane %v2383, 4
        %v2397 = vsel %vm375, %v2396, %v2359
        %v2398 = vrot.slane %v2359, 4
        %v2399 = vsel %vm375, %v2383, %v2398
        %v2400 = vrot.slane %v2387, 4
        %v2401 = vsel %vm375, %v2400, %v2363
        %v2402 = vrot.slane %v2363, 4
        %v2403 = vsel %vm375, %v2387, %v2402
        %v2404 = vrot.slane %v2271, 4
        %v2405 = vsel %vm375, %v2404, %v2265
        %v2406 = vrot.slane %v2265, 4
        %v2407 = vsel %vm375, %v2271, %v2406
        %v2409 = vunpack.c.l.s4 1983009808
        %v2410 = vunpack.c.0.s8 %v2409
        %v2411 = vperm.slane %v2405, %v2410
        %v2413 = vunpack.c.l.s4 1983009808
        %v2414 = vunpack.c.0.s8 %v2413
        %v2415 = vperm.slane %v2407, %v2414
        %v2416 = vrot.slane %v2274, 4
        %v2417 = vsel %vm375, %v2416, %v2268
        %v2418 = vrot.slane %v2268, 4
        %v2419 = vsel %vm375, %v2274, %v2418
        %v2421 = vunpack.c.l.s4 1983009808
        %v2422 = vunpack.c.0.s8 %v2421
        %v2423 = vperm.slane %v2417, %v2422
        %v2425 = vunpack.c.l.s4 1983009808
        %v2426 = vunpack.c.0.s8 %v2425
        %v2427 = vperm.slane %v2419, %v2426
        %v2428 = vrot.slane %v2287, 4
        %v2429 = vsel %vm375, %v2428, %v2277
        %v2430 = vrot.slane %v2277, 4
        %v2431 = vsel %vm375, %v2287, %v2430
        %v2433 = vunpack.c.l.s4 1983009808
        %v2434 = vunpack.c.0.s8 %v2433
        %v2435 = vperm.slane %v2429, %v2434
        %v2437 = vunpack.c.l.s4 1983009808
        %v2438 = vunpack.c.0.s8 %v2437
        %v2439 = vperm.slane %v2431, %v2438
        %v2440 = vrot.slane %v2290, 4
        %v2441 = vsel %vm375, %v2440, %v2280
        %v2442 = vrot.slane %v2280, 4
        %v2443 = vsel %vm375, %v2290, %v2442
        %v2445 = vunpack.c.l.s4 1983009808
        %v2446 = vunpack.c.0.s8 %v2445
        %v2447 = vperm.slane %v2441, %v2446
        %v2449 = vunpack.c.l.s4 1983009808
        %v2450 = vunpack.c.0.s8 %v2449
        %v2451 = vperm.slane %v2443, %v2450
        %v2452 = vrot.slane %v2423, 4
        %v2453 = vsel %vm375, %v2452, %v2411
        %v2454 = vrot.slane %v2411, 4
        %v2455 = vsel %vm375, %v2423, %v2454
        %v2457 = vunpack.c.l.s4 1934713408
        %v2458 = vunpack.c.0.s8 %v2457
        %v2459 = vperm.slane %v2453, %v2458
        %v2461 = vunpack.c.l.s4 1934713408
        %v2462 = vunpack.c.0.s8 %v2461
        %v2463 = vperm.slane %v2455, %v2462
        %v2464 = vrot.slane %v2427, 4
        %v2465 = vsel %vm375, %v2464, %v2415
        %v2466 = vrot.slane %v2415, 4
        %v2467 = vsel %vm375, %v2427, %v2466
        %v2469 = vunpack.c.l.s4 1934713408
        %v2470 = vunpack.c.0.s8 %v2469
        %v2471 = vperm.slane %v2465, %v2470
        %v2473 = vunpack.c.l.s4 1934713408
        %v2474 = vunpack.c.0.s8 %v2473
        %v2475 = vperm.slane %v2467, %v2474
        %v2476 = vrot.slane %v2447, 4
        %v2477 = vsel %vm375, %v2476, %v2435
        %v2478 = vrot.slane %v2435, 4
        %v2479 = vsel %vm375, %v2447, %v2478
        %v2481 = vunpack.c.l.s4 1934713408
        %v2482 = vunpack.c.0.s8 %v2481
        %v2483 = vperm.slane %v2477, %v2482
        %v2485 = vunpack.c.l.s4 1934713408
        %v2486 = vunpack.c.0.s8 %v2485
        %v2487 = vperm.slane %v2479, %v2486
        %v2488 = vrot.slane %v2451, 4
        %v2489 = vsel %vm375, %v2488, %v2439
        %v2490 = vrot.slane %v2439, 4
        %v2491 = vsel %vm375, %v2451, %v2490
        %v2493 = vunpack.c.l.s4 1934713408
        %v2494 = vunpack.c.0.s8 %v2493
        %v2495 = vperm.slane %v2489, %v2494
        %v2497 = vunpack.c.l.s4 1934713408
        %v2498 = vunpack.c.0.s8 %v2497
        %v2499 = vperm.slane %v2491, %v2498
        %v2500 = vrot.slane %v2483, 4
        %v2501 = vsel %vm375, %v2500, %v2459
        %v2502 = vrot.slane %v2459, 4
        %v2503 = vsel %vm375, %v2483, %v2502
        %v2504 = vrot.slane %v2487, 4
        %v2505 = vsel %vm375, %v2504, %v2463
        %v2506 = vrot.slane %v2463, 4
        %v2507 = vsel %vm375, %v2487, %v2506
        %v2508 = vrot.slane %v2495, 4
        %v2509 = vsel %vm375, %v2508, %v2471
        %v2510 = vrot.slane %v2471, 4
        %v2511 = vsel %vm375, %v2495, %v2510
        %v2512 = vrot.slane %v2499, 4
        %v2513 = vsel %vm375, %v2512, %v2475
        %v2514 = vrot.slane %v2475, 4
        %v2515 = vsel %vm375, %v2499, %v2514
        %v2516 = vrot.slane %v2393, 4
        %v2517 = vsel %vm375, %v2516, %v2389
        %v2518 = vrot.slane %v2389, 4
        %v2519 = vsel %vm375, %v2393, %v2518
        %v2521 = vunpack.c.l.s4 1983009808
        %v2522 = vunpack.c.0.s8 %v2521
        %v2523 = vperm.slane %v2517, %v2522
        %v2525 = vunpack.c.l.s4 1983009808
        %v2526 = vunpack.c.0.s8 %v2525
        %v2527 = vperm.slane %v2519, %v2526
        %v2528 = vrot.slane %v2395, 4
        %v2529 = vsel %vm375, %v2528, %v2391
        %v2530 = vrot.slane %v2391, 4
        %v2531 = vsel %vm375, %v2395, %v2530
        %v2533 = vunpack.c.l.s4 1983009808
        %v2534 = vunpack.c.0.s8 %v2533
        %v2535 = vperm.slane %v2529, %v2534
        %v2537 = vunpack.c.l.s4 1983009808
        %v2538 = vunpack.c.0.s8 %v2537
        %v2539 = vperm.slane %v2531, %v2538
        %v2540 = vrot.slane %v2401, 4
        %v2541 = vsel %vm375, %v2540, %v2397
        %v2542 = vrot.slane %v2397, 4
        %v2543 = vsel %vm375, %v2401, %v2542
        %v2545 = vunpack.c.l.s4 1983009808
        %v2546 = vunpack.c.0.s8 %v2545
        %v2547 = vperm.slane %v2541, %v2546
        %v2549 = vunpack.c.l.s4 1983009808
        %v2550 = vunpack.c.0.s8 %v2549
        %v2551 = vperm.slane %v2543, %v2550
        %v2552 = vrot.slane %v2403, 4
        %v2553 = vsel %vm375, %v2552, %v2399
        %v2554 = vrot.slane %v2399, 4
        %v2555 = vsel %vm375, %v2403, %v2554
        %v2557 = vunpack.c.l.s4 1983009808
        %v2558 = vunpack.c.0.s8 %v2557
        %v2559 = vperm.slane %v2553, %v2558
        %v2561 = vunpack.c.l.s4 1983009808
        %v2562 = vunpack.c.0.s8 %v2561
        %v2563 = vperm.slane %v2555, %v2562
        %v2564 = vrot.slane %v2535, 4
        %v2565 = vsel %vm375, %v2564, %v2523
        %v2566 = vrot.slane %v2523, 4
        %v2567 = vsel %vm375, %v2535, %v2566
        %v2569 = vunpack.c.l.s4 1934713408
        %v2570 = vunpack.c.0.s8 %v2569
        %v2571 = vperm.slane %v2565, %v2570
        %v2573 = vunpack.c.l.s4 1934713408
        %v2574 = vunpack.c.0.s8 %v2573
        %v2575 = vperm.slane %v2567, %v2574
        %v2576 = vrot.slane %v2539, 4
        %v2577 = vsel %vm375, %v2576, %v2527
        %v2578 = vrot.slane %v2527, 4
        %v2579 = vsel %vm375, %v2539, %v2578
        %v2581 = vunpack.c.l.s4 1934713408
        %v2582 = vunpack.c.0.s8 %v2581
        %v2583 = vperm.slane %v2577, %v2582
        %v2585 = vunpack.c.l.s4 1934713408
        %v2586 = vunpack.c.0.s8 %v2585
        %v2587 = vperm.slane %v2579, %v2586
        %v2588 = vrot.slane %v2559, 4
        %v2589 = vsel %vm375, %v2588, %v2547
        %v2590 = vrot.slane %v2547, 4
        %v2591 = vsel %vm375, %v2559, %v2590
        %v2593 = vunpack.c.l.s4 1934713408
        %v2594 = vunpack.c.0.s8 %v2593
        %v2595 = vperm.slane %v2589, %v2594
        %v2597 = vunpack.c.l.s4 1934713408
        %v2598 = vunpack.c.0.s8 %v2597
        %v2599 = vperm.slane %v2591, %v2598
        %v2600 = vrot.slane %v2563, 4
        %v2601 = vsel %vm375, %v2600, %v2551
        %v2602 = vrot.slane %v2551, 4
        %v2603 = vsel %vm375, %v2563, %v2602
        %v2605 = vunpack.c.l.s4 1934713408
        %v2606 = vunpack.c.0.s8 %v2605
        %v2607 = vperm.slane %v2601, %v2606
        %v2609 = vunpack.c.l.s4 1934713408
        %v2610 = vunpack.c.0.s8 %v2609
        %v2611 = vperm.slane %v2603, %v2610
        %v2612 = vrot.slane %v2595, 4
        %v2613 = vsel %vm375, %v2612, %v2571
        %v2614 = vrot.slane %v2571, 4
        %v2615 = vsel %vm375, %v2595, %v2614
        %v2616 = vrot.slane %v2599, 4
        %v2617 = vsel %vm375, %v2616, %v2575
        %v2618 = vrot.slane %v2575, 4
        %v2619 = vsel %vm375, %v2599, %v2618
        %v2620 = vrot.slane %v2607, 4
        %v2621 = vsel %vm375, %v2620, %v2583
        %v2622 = vrot.slane %v2583, 4
        %v2623 = vsel %vm375, %v2607, %v2622
        %v2624 = vrot.slane %v2611, 4
        %v2625 = vsel %vm375, %v2624, %v2587
        %v2626 = vrot.slane %v2587, 4
        %v2627 = vsel %vm375, %v2611, %v2626
        %v2628 = vrot.slane %v2505, 4
        %v2629 = vsel %vm375, %v2628, %v2501
        %v2630 = vrot.slane %v2501, 4
        %v2631 = vsel %vm375, %v2505, %v2630
        %v2633 = vunpack.c.l.s4 1983009808
        %v2634 = vunpack.c.0.s8 %v2633
        %v2635 = vperm.slane %v2629, %v2634
        %v2637 = vunpack.c.l.s4 1983009808
        %v2638 = vunpack.c.0.s8 %v2637
        %v2639 = vperm.slane %v2631, %v2638
        %v2640 = vrot.slane %v2507, 4
        %v2641 = vsel %vm375, %v2640, %v2503
        %v2642 = vrot.slane %v2503, 4
        %v2643 = vsel %vm375, %v2507, %v2642
        %v2645 = vunpack.c.l.s4 1983009808
        %v2646 = vunpack.c.0.s8 %v2645
        %v2647 = vperm.slane %v2641, %v2646
        %v2649 = vunpack.c.l.s4 1983009808
        %v2650 = vunpack.c.0.s8 %v2649
        %v2651 = vperm.slane %v2643, %v2650
        %v2652 = vrot.slane %v2513, 4
        %v2653 = vsel %vm375, %v2652, %v2509
        %v2654 = vrot.slane %v2509, 4
        %v2655 = vsel %vm375, %v2513, %v2654
        %v2657 = vunpack.c.l.s4 1983009808
        %v2658 = vunpack.c.0.s8 %v2657
        %v2659 = vperm.slane %v2653, %v2658
        %v2661 = vunpack.c.l.s4 1983009808
        %v2662 = vunpack.c.0.s8 %v2661
        %v2663 = vperm.slane %v2655, %v2662
        %v2664 = vrot.slane %v2515, 4
        %v2665 = vsel %vm375, %v2664, %v2511
        %v2666 = vrot.slane %v2511, 4
        %v2667 = vsel %vm375, %v2515, %v2666
        %v2669 = vunpack.c.l.s4 1983009808
        %v2670 = vunpack.c.0.s8 %v2669
        %v2671 = vperm.slane %v2665, %v2670
        %v2673 = vunpack.c.l.s4 1983009808
        %v2674 = vunpack.c.0.s8 %v2673
        %v2675 = vperm.slane %v2667, %v2674
        %v2676 = vrot.slane %v2647, 4
        %v2677 = vsel %vm375, %v2676, %v2635
        %v2678 = vrot.slane %v2635, 4
        %v2679 = vsel %vm375, %v2647, %v2678
        %v2681 = vunpack.c.l.s4 1934713408
        %v2682 = vunpack.c.0.s8 %v2681
        %v2683 = vperm.slane %v2677, %v2682
        %v2685 = vunpack.c.l.s4 1934713408
        %v2686 = vunpack.c.0.s8 %v2685
        %v2687 = vperm.slane %v2679, %v2686
        %v2688 = vrot.slane %v2651, 4
        %v2689 = vsel %vm375, %v2688, %v2639
        %v2690 = vrot.slane %v2639, 4
        %v2691 = vsel %vm375, %v2651, %v2690
        %v2693 = vunpack.c.l.s4 1934713408
        %v2694 = vunpack.c.0.s8 %v2693
        %v2695 = vperm.slane %v2689, %v2694
        %v2697 = vunpack.c.l.s4 1934713408
        %v2698 = vunpack.c.0.s8 %v2697
        %v2699 = vperm.slane %v2691, %v2698
        %v2700 = vrot.slane %v2671, 4
        %v2701 = vsel %vm375, %v2700, %v2659
        %v2702 = vrot.slane %v2659, 4
        %v2703 = vsel %vm375, %v2671, %v2702
        %v2705 = vunpack.c.l.s4 1934713408
        %v2706 = vunpack.c.0.s8 %v2705
        %v2707 = vperm.slane %v2701, %v2706
        %v2709 = vunpack.c.l.s4 1934713408
        %v2710 = vunpack.c.0.s8 %v2709
        %v2711 = vperm.slane %v2703, %v2710
        %v2712 = vrot.slane %v2675, 4
        %v2713 = vsel %vm375, %v2712, %v2663
        %v2714 = vrot.slane %v2663, 4
        %v2715 = vsel %vm375, %v2675, %v2714
        %v2717 = vunpack.c.l.s4 1934713408
        %v2718 = vunpack.c.0.s8 %v2717
        %v2719 = vperm.slane %v2713, %v2718
        %v2721 = vunpack.c.l.s4 1934713408
        %v2722 = vunpack.c.0.s8 %v2721
        %v2723 = vperm.slane %v2715, %v2722
        %v2724 = vrot.slane %v2707, 4
        %v2725 = vsel %vm375, %v2724, %v2683
        %v2726 = vrot.slane %v2683, 4
        %v2727 = vsel %vm375, %v2707, %v2726
        %v2728 = vrot.slane %v2711, 4
        %v2729 = vsel %vm375, %v2728, %v2687
        %v2730 = vrot.slane %v2687, 4
        %v2731 = vsel %vm375, %v2711, %v2730
        %v2732 = vrot.slane %v2719, 4
        %v2733 = vsel %vm375, %v2732, %v2695
        %v2734 = vrot.slane %v2695, 4
        %v2735 = vsel %vm375, %v2719, %v2734
        %v2736 = vrot.slane %v2723, 4
        %v2737 = vsel %vm375, %v2736, %v2699
        %v2738 = vrot.slane %v2699, 4
        %v2739 = vsel %vm375, %v2723, %v2738
        %2741 = vrot.lane.b32.xlu0 %v2615, 16
        %v2742 = vpop.permute.xlu0 %2741
        %2745 = vrot.lane.b32.xlu0 %v2617, 32
        %v2746 = vpop.permute.xlu0 %2745
        %2749 = vrot.lane.b32.xlu0 %v2619, 48
        %v2750 = vpop.permute.xlu0 %2749
        %2753 = vrot.lane.b32.xlu0 %v2621, 64
        %v2754 = vpop.permute.xlu0 %2753
        %2757 = vrot.lane.b32.xlu0 %v2623, 80
        %v2758 = vpop.permute.xlu0 %2757
        %2761 = vrot.lane.b32.xlu0 %v2625, 96
        %v2762 = vpop.permute.xlu0 %2761
        %2765 = vrot.lane.b32.xlu0 %v2627, 112
        %v2766 = vpop.permute.xlu0 %2765
        %2769 = vrot.lane.b32.xlu0 %v2727, 16
        %v2770 = vpop.permute.xlu0 %2769
        %2773 = vrot.lane.b32.xlu0 %v2729, 32
        %v2774 = vpop.permute.xlu0 %2773
        %2777 = vrot.lane.b32.xlu0 %v2731, 48
        %v2778 = vpop.permute.xlu0 %2777
        %2781 = vrot.lane.b32.xlu0 %v2733, 64
        %v2782 = vpop.permute.xlu0 %2781
        %2785 = vrot.lane.b32.xlu0 %v2735, 80
        %v2786 = vpop.permute.xlu0 %2785
        %2789 = vrot.lane.b32.xlu0 %v2737, 96
        %v2790 = vpop.permute.xlu0 %2789
        %2793 = vrot.lane.b32.xlu0 %v2739, 112
        %v2794 = vpop.permute.xlu0 %2793
        %v2796 = vsel %vm598, %v2613, %v2742
        %v2797 = vsel %vm614, %v2796, %v2746
        %vm2798 = vcmask 392192
        %v2799 = vsel %vm2798, %v2797, %v2750
        %vm2800 = vcmask 523264
        %v2801 = vsel %vm2800, %v2799, %v2754
        %vm2802 = vcmask 654336
        %v2803 = vsel %vm2802, %v2801, %v2758
        %vm2804 = vcmask 785408
        %v2805 = vsel %vm2804, %v2803, %v2762
        %vm2806 = vcmask 916480
        %v2807 = vsel %vm2806, %v2805, %v2766
        %v2808 = vsel %vm598, %v2725, %v2770
        %v2809 = vsel %vm614, %v2808, %v2774
        %v2810 = vsel %vm2798, %v2809, %v2778
        %v2811 = vsel %vm2800, %v2810, %v2782
        %v2812 = vsel %vm2802, %v2811, %v2786
        %v2813 = vsel %vm2804, %v2812, %v2790
        %v2814 = vsel %vm2806, %v2813, %v2794
        %2815 = vst [vmem:[%s298] sm:$0xff] %v2807
        %2816 = vst [vmem:[%s298 + $0x8] sm:$0xff] %v2814
        %s2817 = sand.u32 %s184, 1
        %s2818 = scalar_lea.sflag [#allocation6], %s2817
        %s2819 = sand.u32 %s184, 1
        %s2820 = smul.addr %s2819, 16
        %s2821 = scalar_lea.vmem [#allocation7], %s2820
        // Predicated region
        $region53: #{tpu_custom_call.1} parent=47 // pred_check
          %p2822 = pneg %p194
        $region54: #{tpu_custom_call.1} parent=47 // pred_check_branch
          %2824 = sbr.rel (%p2822) target = $region56
        $region55: #{tpu_custom_call.1} parent=47 // pred_region
          %2826 = vsyncadd %s2818, 0
          %s2827 = smul.addr %s24, 2
          %s2828 = smul.addr %s2827, 8
          %s2829 = scalar_lea.hbm %s7, %s2828
          %s2831 = sshll.u32 %s2821, 4
          %s2832 = int_to_ptr.vmem [resolvable:$true] %s2831
          %s2833 = sshll.u32 %s2829, 4
          %s2834 = int_to_ptr.hbm [resolvable:$true] %s2833
          %2836 = dma.vmem_to_hbm [thread:$0]  %s2832, 256, %s2834, %s2818
        $region56: #{tpu_custom_call.1} parent=47 // pred_fallthru
          _
      $region48: #{tpu_custom_call.1} parent=5 // pred_fallthru
        _
      %p2837 = scmp.le.s32.totalorder 2, %s19
      // Predicated region
      $region57: #{tpu_custom_call.1} parent=5 // pred_check
        %p2838 = pneg %p2837
      $region58: #{tpu_custom_call.1} parent=5 // pred_check_branch
        %2840 = sbr.rel (%p2838) target = $region60
      $region59: #{tpu_custom_call.1} parent=5 // pred_region
        %s2841 = ssub.s32 %s19, 2
        // Predicated region
        $region61: #{tpu_custom_call.1} parent=59 // pred_check
          %p2842 = pneg %p200
        $region62: #{tpu_custom_call.1} parent=59 // pred_check_branch
          %2844 = sbr.rel (%p2842) target = $region64
        $region63: #{tpu_custom_call.1} parent=59 // pred_region
          %s2845 = sand.u32 %s185, 1
          %s2846 = scalar_lea.sflag [#allocation6], %s2845
          %s2847 = sand.u32 %s185, 1
          %s2848 = smul.addr %s2847, 16
          %s2849 = scalar_lea.vmem [#allocation7], %s2848
          %2851 = dma.done %s2846, 256
        $region64: #{tpu_custom_call.1} parent=59 // pred_fallthru
          _
      $region60: #{tpu_custom_call.1} parent=5 // pred_fallthru
        _
    $region6: #{tpu_custom_call.1} parent=1 // loop_footer
      %s23 = sadd.s32 1, %s19
    $region7: #{tpu_custom_call.1} parent=1 // loop_footer_branch
      %18 = sbr.rel target = $region3
    $region8: #{tpu_custom_call.1} parent=1 // loop_exit
      _
    %2852 = vsyncpa [#allocation5], 1
    %s2853 = scalar_lea.sflag [#allocation5], 1
    %2854 = vsyncpa %s2853, 1
    %2855 = vsyncpa [#allocation6], 1
    %s2856 = scalar_lea.sflag [#allocation6], 1
    %2857 = vsyncpa %s2856, 1

</llo_original>
